<compile_context>
chip_gen: v5e
topology: v5e:2x2
jax: 0.10.0
libtpu: 0.0.40
codegen_flags: <defaults>
</compile_context>

<pallas_src>
import functools

import jax
import jax.numpy as jnp
from jax import lax
from jax.experimental import pallas as pl
from jax.experimental.pallas import tpu as pltpu

EPS = 1e-5            # PyTorch BatchNorm1d default
F_IN, F_PAD = 5, 8
H1, H1P = 100, 128
H2, H2P = 200, 256

_VMEM_LIMIT_BYTES = 48 * 1024 * 1024   # fits v5e/v6e (128 MiB) and v7x (64 MiB)


def _round_up(x, m):
    return (x + m - 1) // m * m


def _lin1(x_ref, w1_ref):
    # Linear(5,100) on the VPU: K is tiny, so 5 broadcast FMAs beat pushing
    # tile_b rows through the MXU and keep the MXU free for f1 @ W2.
    # Padded input columns (5..7) and padded W1 rows are zero -> skipping them
    # is exact; padded batch rows of x are zero -> h1 rows are exactly 0 there.
    h = x_ref[:, 0:1] * w1_ref[0:1, :]
    for k in range(1, F_IN):
        h = h + x_ref[:, k:k + 1] * w1_ref[k:k + 1, :]
    return h


def _bn_relu(h, s_ref):
    # Folded BatchNorm + ReLU: one FMA + one max per element.
    return jnp.maximum(h * s_ref[0:1, :] + s_ref[1:2, :], 0.0)


def _finalize(s_ref, g_ref, be_ref, inv_b):
    # Turn [sum; sumsq] into [scale; shift] in place.
    mu = s_ref[0:1, :] * inv_b
    var = jnp.maximum(s_ref[1:2, :] * inv_b - mu * mu, 0.0)
    scale = g_ref[...] * lax.rsqrt(var + EPS)
    shift = be_ref[...] - mu * scale
    s_ref[0:1, :] = scale
    s_ref[1:2, :] = shift


def _stats_kernel(x_ref, w1_ref, g1_ref, be1_ref, w2_ref, g2_ref, be2_ref,
                  s1_ref, s2_ref, *, batch, tile_b, padded_rows):
    """Sequential pass: phase 0 -> BN1 scale/shift, phase 1 -> BN2 scale/shift."""
    phase = pl.program_id(0)
    tile = pl.program_id(1)
    last_tile = pl.num_programs(1) - 1
    inv_b = 1.0 / float(batch)

    h1 = _lin1(x_ref, w1_ref)                      # (tile_b, 128) f32

    # ---------------- phase 0: BN1 batch statistics of h1 = x @ W1 ------------
    @pl.when(phase == 0)
    def _():
        @pl.when(tile == 0)
        def _():
            s1_ref[...] = jnp.zeros_like(s1_ref)

        s1_ref[0:1, :] += jnp.sum(h1, axis=0, keepdims=True)
        s1_ref[1:2, :] += jnp.sum(h1 * h1, axis=0, keepdims=True)

        @pl.when(tile == last_tile)
        def _():
            _finalize(s1_ref, g1_ref, be1_ref, inv_b)

    # -------- phase 1: BN2 batch statistics of h2 = relu(bn1(h1)) @ W2 --------
    @pl.when(phase == 1)
    def _():
        @pl.when(tile == 0)
        def _():
            s2_ref[...] = jnp.zeros_like(s2_ref)

        f1 = _bn_relu(h1, s1_ref)
        if padded_rows:
            # Zero padded batch rows so they do not pollute the BN2 statistics.
            row = tile * tile_b + lax.broadcasted_iota(jnp.int32, (tile_b, 1), 0)
            f1 = jnp.where(row < batch, f1, 0.0)
        # bf16 MXU operands, f32 accumulation (same numerics as the apply pass,
        # so the BN2 statistics exactly match the values they will normalize).
        h2 = jnp.dot(f1.astype(jnp.bfloat16), w2_ref[...],
                     preferred_element_type=jnp.float32)
        s2_ref[0:1, :] += jnp.sum(h2, axis=0, keepdims=True)
        s2_ref[1:2, :] += jnp.sum(h2 * h2, axis=0, keepdims=True)

        @pl.when(tile == last_tile)
        def _():
            _finalize(s2_ref, g2_ref, be2_ref, inv_b)


def _apply_kernel(x_ref, w1_ref, s1_ref, w2_ref, s2_ref, w3_ref, o_ref):
    """Batch-parallel pass: apply the full fused pipeline to one batch tile."""
    h1 = _lin1(x_ref, w1_ref)
    f1 = _bn_relu(h1, s1_ref)
    h2 = jnp.dot(f1.astype(jnp.bfloat16), w2_ref[...],
                 preferred_element_type=jnp.float32)
    f2 = _bn_relu(h2, s2_ref)
    # Linear(200,1) as a VPU multiply + lane reduction (no N=1 MXU matmul);
    # padded lanes of w3 (and of f2) are exactly zero.
    out_row = jnp.sum(f2 * w3_ref[...], axis=-1)          # (tile_b,)
    o_ref[0, 0, :] = out_row                               # lane-dense row store


def mynet_forward(x, params, *, tile_b=2048):
    """MyNet forward, training-mode BatchNorm (fresh-module default), eps=1e-5.

    NOTE: b1/b2 are dropped inside the kernels — valid only for training-mode
    (batch-statistics) BatchNorm, where the batch-mean subtraction cancels them.
    The big matmul runs with bf16 MXU operands and f32 accumulation.
    """
    (w1, b1, g1, be1, w2, b2, g2, be2, w3, b3) = params
    del b1, b2  # cancelled exactly by the BN batch-mean subtraction

    B = x.shape[0]
    tile_b = _round_up(min(tile_b, _round_up(B, 128)), 128)
    b_pad = _round_up(B, tile_b)
    num_tiles = b_pad // tile_b

    f32 = jnp.float32
    bf16 = jnp.bfloat16
    # Zero-pad to (8,128)-aligned shapes. Padded beta / weight rows / cols are
    # zero, so padded lanes stay exactly 0 through BN/ReLU and never reach the
    # output.
    x_p = jnp.zeros((b_pad, F_PAD), f32).at[:B, :F_IN].set(x.astype(f32))
    w1_p = jnp.zeros((F_PAD, H1P), f32).at[:F_IN, :H1].set(w1)
    g1_p = jnp.ones((1, H1P), f32).at[:, :H1].set(g1)
    be1_p = jnp.zeros((1, H1P), f32).at[:, :H1].set(be1)
    w2_p = jnp.zeros((H1P, H2P), bf16).at[:H1, :H2].set(w2.astype(bf16))
    g2_p = jnp.ones((1, H2P), f32).at[:, :H2].set(g2)
    be2_p = jnp.zeros((1, H2P), f32).at[:, :H2].set(be2)
    w3_p = jnp.zeros((1, H2P), f32).at[0, :H2].set(w3[:, 0])

    # ------------------------- pass 1: BN statistics -------------------------
    stats_kernel = functools.partial(_stats_kernel, batch=B, tile_b=tile_b,
                                     padded_rows=(b_pad != B))

    def res2(shape):                      # VMEM-resident, 2-D grid index map
        return pl.BlockSpec(shape, lambda p, t: (0, 0))

    s1, s2 = pl.pallas_call(
        stats_kernel,
        out_shape=(jax.ShapeDtypeStruct((2, H1P), f32),
                   jax.ShapeDtypeStruct((2, H2P), f32)),
        grid_spec=pltpu.PrefetchScalarGridSpec(
            num_scalar_prefetch=0,
            grid=(2, num_tiles),                           # (phase, batch tile)
            in_specs=[
                pl.BlockSpec((tile_b, F_PAD), lambda p, t: (t, 0)),  # x streams
                res2((F_PAD, H1P)),      # W1
                res2((1, H1P)),          # gamma1
                res2((1, H1P)),          # beta1
                res2((H1P, H2P)),        # W2 (bf16)
                res2((1, H2P)),          # gamma2
                res2((1, H2P)),          # beta2
            ],
            out_specs=[
                res2((2, H1P)),          # BN1: [sum; sumsq] -> [scale; shift]
                res2((2, H2P)),          # BN2: [sum; sumsq] -> [scale; shift]
            ],
        ),
        compiler_params=pltpu.CompilerParams(
            dimension_semantics=("arbitrary", "arbitrary"),
            vmem_limit_bytes=_VMEM_LIMIT_BYTES),
    )(x_p, w1_p, g1_p, be1_p, w2_p, g2_p, be2_p)

    # --------------------------- pass 2: apply --------------------------------
    def res1(shape):                      # VMEM-resident, 1-D grid index map
        return pl.BlockSpec(shape, lambda t: (0, 0))

    out = pl.pallas_call(
        _apply_kernel,
        out_shape=jax.ShapeDtypeStruct((num_tiles, 1, tile_b), f32),
        grid_spec=pltpu.PrefetchScalarGridSpec(
            num_scalar_prefetch=0,
            grid=(num_tiles,),
            in_specs=[
                pl.BlockSpec((tile_b, F_PAD), lambda t: (t, 0)),     # x streams
                res1((F_PAD, H1P)),      # W1
                res1((2, H1P)),          # BN1 [scale; shift]
                res1((H1P, H2P)),        # W2 (bf16)
                res1((2, H2P)),          # BN2 [scale; shift]
                res1((1, H2P)),          # w3 row
            ],
            out_specs=pl.BlockSpec((1, 1, tile_b), lambda t: (t, 0, 0)),
        ),
        compiler_params=pltpu.CompilerParams(
            dimension_semantics=("parallel",),             # usable by 2nd TC on v7x
            vmem_limit_bytes=_VMEM_LIMIT_BYTES),
    )(x_p, w1_p, s1, w2_p, s2, w3_p)

    # Lane-dense (num_tiles, 1, tile_b) slab -> (B, 1); add final Linear bias.
    return out.reshape(b_pad, 1)[:B] + b3


def init_params(key):
    """Deterministic synthetic parameters with the shapes MyNet.__init__ implies."""
    ks = jax.random.split(key, 6)
    w1 = jax.random.normal(ks[0], (5, 100), jnp.float32) * 0.1
    b1 = jax.random.normal(ks[1], (1, 100), jnp.float32) * 0.1
    g1 = jnp.ones((1, 100), jnp.float32)
    be1 = jnp.zeros((1, 100), jnp.float32)
    w2 = jax.random.normal(ks[2], (100, 200), jnp.float32) * 0.1
    b2 = jax.random.normal(ks[3], (1, 200), jnp.float32) * 0.1
    g2 = jnp.ones((1, 200), jnp.float32)
    be2 = jnp.zeros((1, 200), jnp.float32)
    w3 = jax.random.normal(ks[4], (200, 1), jnp.float32) * 0.1
    b3 = jax.random.normal(ks[5], (1, 1), jnp.float32) * 0.1
    return (w1, b1, g1, be1, w2, b2, g2, be2, w3, b3)


def mynet_ref(x, params):
    """Plain-JAX f32 reference with the original (two-pass BN, with biases) semantics."""
    (w1, b1, g1, be1, w2, b2, g2, be2, w3, b3) = params

    def bn(h, g, be):
        mu = jnp.mean(h, axis=0, keepdims=True)
        var = jnp.mean((h - mu) ** 2, axis=0, keepdims=True)
        return (h - mu) / jnp.sqrt(var + EPS) * g + be

    f1 = jnp.maximum(bn(x @ w1 + b1, g1, be1), 0.0)
    f2 = jnp.maximum(bn(f1 @ w2 + b2, g2, be2), 0.0)
    return f2 @ w3 + b3


if __name__ == "__main__":
    key = jax.random.PRNGKey(0)
    kx, kp = jax.random.split(key)
    B = 8
    x = jax.random.normal(kx, (B, F_IN), jnp.float32)
    params = init_params(kp)

    out = mynet_forward(x, params)
    out = jax.block_until_ready(out)

    ref = mynet_ref(x, params)
    assert out.shape == (B, 1), out.shape
    # bf16 MXU operands (f32 accumulation) => bf16-level tolerance vs f32 reference.
    assert jnp.allclose(out, ref, atol=5e-2, rtol=5e-2), (out, ref)

    print("KERNEL_OK")
</pallas_src>

<mosaic_0001>
module attributes {stable_mosaic.version = 11 : i64} {
  func.func @_stats_kernel(%arg0: i32, %arg1: i32, %arg2: memref<128x8xf32, #tpu.memory_space<vmem>>, %arg3: memref<8x128xf32, #tpu.memory_space<vmem>>, %arg4: memref<1x128xf32, #tpu.memory_space<vmem>>, %arg5: memref<1x128xf32, #tpu.memory_space<vmem>>, %arg6: memref<128x256xbf16, #tpu.memory_space<vmem>>, %arg7: memref<1x256xf32, #tpu.memory_space<vmem>>, %arg8: memref<1x256xf32, #tpu.memory_space<vmem>>, %arg9: memref<2x128xf32, #tpu.memory_space<vmem>>, %arg10: memref<2x256xf32, #tpu.memory_space<vmem>>) attributes {dimension_semantics = [#tpu.dimension_semantics<arbitrary>, #tpu.dimension_semantics<arbitrary>], iteration_bounds = array<i64: 2, 1>, scalar_prefetch = 0 : i64, scratch_operands = 0 : i64, tpu.core_type = #tpu.core_type<tc>, window_params = [{transform_indices = @transform_0, window_bounds = array<i64: 128, 8>}, {pipeline_mode = #tpu.pipeline_mode<synchronous>, transform_indices = @transform_1, window_bounds = array<i64: 8, 128>}, {pipeline_mode = #tpu.pipeline_mode<synchronous>, transform_indices = @transform_2, window_bounds = array<i64: 1, 128>}, {pipeline_mode = #tpu.pipeline_mode<synchronous>, transform_indices = @transform_3, window_bounds = array<i64: 1, 128>}, {pipeline_mode = #tpu.pipeline_mode<synchronous>, transform_indices = @transform_4, window_bounds = array<i64: 128, 256>}, {pipeline_mode = #tpu.pipeline_mode<synchronous>, transform_indices = @transform_5, window_bounds = array<i64: 1, 256>}, {pipeline_mode = #tpu.pipeline_mode<synchronous>, transform_indices = @transform_6, window_bounds = array<i64: 1, 256>}, {pipeline_mode = #tpu.pipeline_mode<synchronous>, transform_indices = @transform_7, window_bounds = array<i64: 2, 128>}, {pipeline_mode = #tpu.pipeline_mode<synchronous>, transform_indices = @transform_8, window_bounds = array<i64: 2, 256>}]} {
    %c0 = arith.constant 0 : index
    %c0_0 = arith.constant 0 : index
    %0 = vector.load %arg2[%c0, %c0_0] : memref<128x8xf32, #tpu.memory_space<vmem>>, vector<128x1xf32>
    %c0_1 = arith.constant 0 : index
    %c0_2 = arith.constant 0 : index
    %1 = vector.load %arg3[%c0_1, %c0_2] : memref<8x128xf32, #tpu.memory_space<vmem>>, vector<1x128xf32>
    %2 = vector.broadcast %0 : vector<128x1xf32> to vector<128x128xf32>
    %3 = vector.broadcast %1 : vector<1x128xf32> to vector<128x128xf32>
    %4 = arith.mulf %2, %3 : vector<128x128xf32>
    %c0_3 = arith.constant 0 : index
    %c1 = arith.constant 1 : index
    %5 = vector.load %arg2[%c0_3, %c1] : memref<128x8xf32, #tpu.memory_space<vmem>>, vector<128x1xf32>
    %c1_4 = arith.constant 1 : index
    %c0_5 = arith.constant 0 : index
    %6 = vector.load %arg3[%c1_4, %c0_5] : memref<8x128xf32, #tpu.memory_space<vmem>>, vector<1x128xf32>
    %7 = vector.broadcast %5 : vector<128x1xf32> to vector<128x128xf32>
    %8 = vector.broadcast %6 : vector<1x128xf32> to vector<128x128xf32>
    %9 = arith.mulf %7, %8 : vector<128x128xf32>
    %10 = arith.addf %4, %9 : vector<128x128xf32>
    %c0_6 = arith.constant 0 : index
    %c2 = arith.constant 2 : index
    %11 = vector.load %arg2[%c0_6, %c2] : memref<128x8xf32, #tpu.memory_space<vmem>>, vector<128x1xf32>
    %c2_7 = arith.constant 2 : index
    %c0_8 = arith.constant 0 : index
    %12 = vector.load %arg3[%c2_7, %c0_8] : memref<8x128xf32, #tpu.memory_space<vmem>>, vector<1x128xf32>
    %13 = vector.broadcast %11 : vector<128x1xf32> to vector<128x128xf32>
    %14 = vector.broadcast %12 : vector<1x128xf32> to vector<128x128xf32>
    %15 = arith.mulf %13, %14 : vector<128x128xf32>
    %16 = arith.addf %10, %15 : vector<128x128xf32>
    %c0_9 = arith.constant 0 : index
    %c3 = arith.constant 3 : index
    %17 = vector.load %arg2[%c0_9, %c3] : memref<128x8xf32, #tpu.memory_space<vmem>>, vector<128x1xf32>
    %c3_10 = arith.constant 3 : index
    %c0_11 = arith.constant 0 : index
    %18 = vector.load %arg3[%c3_10, %c0_11] : memref<8x128xf32, #tpu.memory_space<vmem>>, vector<1x128xf32>
    %19 = vector.broadcast %17 : vector<128x1xf32> to vector<128x128xf32>
    %20 = vector.broadcast %18 : vector<1x128xf32> to vector<128x128xf32>
    %21 = arith.mulf %19, %20 : vector<128x128xf32>
    %22 = arith.addf %16, %21 : vector<128x128xf32>
    %c0_12 = arith.constant 0 : index
    %c4 = arith.constant 4 : index
    %23 = vector.load %arg2[%c0_12, %c4] : memref<128x8xf32, #tpu.memory_space<vmem>>, vector<128x1xf32>
    %c4_13 = arith.constant 4 : index
    %c0_14 = arith.constant 0 : index
    %24 = vector.load %arg3[%c4_13, %c0_14] : memref<8x128xf32, #tpu.memory_space<vmem>>, vector<1x128xf32>
    %25 = vector.broadcast %23 : vector<128x1xf32> to vector<128x128xf32>
    %26 = vector.broadcast %24 : vector<1x128xf32> to vector<128x128xf32>
    %27 = arith.mulf %25, %26 : vector<128x128xf32>
    %28 = arith.addf %22, %27 : vector<128x128xf32>
    %c0_i32 = arith.constant 0 : i32
    %29 = arith.cmpi eq, %arg0, %c0_i32 : i32
    %30 = arith.extui %29 : i1 to i32
    %c0_i32_15 = arith.constant 0 : i32
    %31 = arith.cmpi ne, %30, %c0_i32_15 : i32
    scf.if %31 {
      %c0_i32_17 = arith.constant 0 : i32
      %35 = arith.cmpi eq, %arg1, %c0_i32_17 : i32
      %36 = arith.extui %35 : i1 to i32
      %c0_i32_18 = arith.constant 0 : i32
      %37 = arith.cmpi ne, %36, %c0_i32_18 : i32
      scf.if %37 {
        %cst_30 = arith.constant 0.000000e+00 : f32
        %52 = vector.broadcast %cst_30 : f32 to vector<2x128xf32>
        %c0_31 = arith.constant 0 : index
        %c0_32 = arith.constant 0 : index
        %53 = vector.load %arg9[%c0_31, %c0_32] : memref<2x128xf32, #tpu.memory_space<vmem>>, vector<2x128xf32>
        tpu.vector_store %arg9[%c0_31, %c0_32], %52 {strides = array<i32>} : memref<2x128xf32, #tpu.memory_space<vmem>>, vector<2x128xf32>,
      } else {
      }
      %c0_19 = arith.constant 0 : index
      %c0_20 = arith.constant 0 : index
      %38 = vector.load %arg9[%c0_19, %c0_20] : memref<2x128xf32, #tpu.memory_space<vmem>>, vector<1x128xf32>
      %cst = arith.constant dense<0.000000e+00> : vector<128xf32>
      %39 = vector.multi_reduction <add>, %28, %cst [0] : vector<128x128xf32> to vector<128xf32>
      %40 = vector.shape_cast %39 : vector<128xf32> to vector<1x128xf32>
      %41 = arith.addf %38, %40 : vector<1x128xf32>
      %c0_21 = arith.constant 0 : index
      %c0_22 = arith.constant 0 : index
      %42 = vector.load %arg9[%c0_21, %c0_22] : memref<2x128xf32, #tpu.memory_space<vmem>>, vector<1x128xf32>
      tpu.vector_store %arg9[%c0_21, %c0_22], %41 {strides = array<i32>} : memref<2x128xf32, #tpu.memory_space<vmem>>, vector<1x128xf32>,
      %c1_23 = arith.constant 1 : index
      %c0_24 = arith.constant 0 : index
      %43 = vector.load %arg9[%c1_23, %c0_24] : memref<2x128xf32, #tpu.memory_space<vmem>>, vector<1x128xf32>
      %44 = arith.mulf %28, %28 : vector<128x128xf32>
      %cst_25 = arith.constant dense<0.000000e+00> : vector<128xf32>
      %45 = vector.multi_reduction <add>, %44, %cst_25 [0] : vector<128x128xf32> to vector<128xf32>
      %46 = vector.shape_cast %45 : vector<128xf32> to vector<1x128xf32>
      %47 = arith.addf %43, %46 : vector<1x128xf32>
      %c1_26 = arith.constant 1 : index
      %c0_27 = arith.constant 0 : index
      %48 = vector.load %arg9[%c1_26, %c0_27] : memref<2x128xf32, #tpu.memory_space<vmem>>, vector<1x128xf32>
      tpu.vector_store %arg9[%c1_26, %c0_27], %47 {strides = array<i32>} : memref<2x128xf32, #tpu.memory_space<vmem>>, vector<1x128xf32>,
      %c0_i32_28 = arith.constant 0 : i32
      %49 = arith.cmpi eq, %arg1, %c0_i32_28 : i32
      %50 = arith.extui %49 : i1 to i32
      %c0_i32_29 = arith.constant 0 : i32
      %51 = arith.cmpi ne, %50, %c0_i32_29 : i32
      scf.if %51 {
        %c0_30 = arith.constant 0 : index
        %c0_31 = arith.constant 0 : index
        %52 = vector.load %arg9[%c0_30, %c0_31] : memref<2x128xf32, #tpu.memory_space<vmem>>, vector<1x128xf32>
        %cst_32 = arith.constant 1.250000e-01 : f32
        %53 = vector.broadcast %cst_32 : f32 to vector<1x128xf32>
        %54 = arith.mulf %52, %53 : vector<1x128xf32>
        %c1_33 = arith.constant 1 : index
        %c0_34 = arith.constant 0 : index
        %55 = vector.load %arg9[%c1_33, %c0_34] : memref<2x128xf32, #tpu.memory_space<vmem>>, vector<1x128xf32>
        %cst_35 = arith.constant 1.250000e-01 : f32
        %56 = vector.broadcast %cst_35 : f32 to vector<1x128xf32>
        %57 = arith.mulf %55, %56 : vector<1x128xf32>
        %58 = arith.mulf %54, %54 : vector<1x128xf32>
        %59 = arith.subf %57, %58 : vector<1x128xf32>
        %cst_36 = arith.constant 0.000000e+00 : f32
        %60 = vector.broadcast %cst_36 : f32 to vector<1x128xf32>
        %61 = arith.maximumf %59, %60 : vector<1x128xf32>
        %c0_37 = arith.constant 0 : index
        %c0_38 = arith.constant 0 : index
        %62 = vector.load %arg4[%c0_37, %c0_38] : memref<1x128xf32, #tpu.memory_space<vmem>>, vector<1x128xf32>
        %cst_39 = arith.constant 9.99999974E-6 : f32
        %63 = vector.broadcast %cst_39 : f32 to vector<1x128xf32>
        %64 = arith.addf %61, %63 : vector<1x128xf32>
        %65 = math.rsqrt %64 : vector<1x128xf32>
        %66 = arith.mulf %62, %65 : vector<1x128xf32>
        %c0_40 = arith.constant 0 : index
        %c0_41 = arith.constant 0 : index
        %67 = vector.load %arg5[%c0_40, %c0_41] : memref<1x128xf32, #tpu.memory_space<vmem>>, vector<1x128xf32>
        %68 = arith.mulf %54, %66 : vector<1x128xf32>
        %69 = arith.subf %67, %68 : vector<1x128xf32>
        %c0_42 = arith.constant 0 : index
        %c0_43 = arith.constant 0 : index
        %70 = vector.load %arg9[%c0_42, %c0_43] : memref<2x128xf32, #tpu.memory_space<vmem>>, vector<1x128xf32>
        tpu.vector_store %arg9[%c0_42, %c0_43], %66 {strides = array<i32>} : memref<2x128xf32, #tpu.memory_space<vmem>>, vector<1x128xf32>,
        %c1_44 = arith.constant 1 : index
        %c0_45 = arith.constant 0 : index
        %71 = vector.load %arg9[%c1_44, %c0_45] : memref<2x128xf32, #tpu.memory_space<vmem>>, vector<1x128xf32>
        tpu.vector_store %arg9[%c1_44, %c0_45], %69 {strides = array<i32>} : memref<2x128xf32, #tpu.memory_space<vmem>>, vector<1x128xf32>,
      } else {
      }
    } else {
    }
    %c1_i32 = arith.constant 1 : i32
    %32 = arith.cmpi eq, %arg0, %c1_i32 : i32
    %33 = arith.extui %32 : i1 to i32
    %c0_i32_16 = arith.constant 0 : i32
    %34 = arith.cmpi ne, %33, %c0_i32_16 : i32
    scf.if %34 {
      %c0_i32_17 = arith.constant 0 : i32
      %35 = arith.cmpi eq, %arg1, %c0_i32_17 : i32
      %36 = arith.extui %35 : i1 to i32
      %c0_i32_18 = arith.constant 0 : i32
      %37 = arith.cmpi ne, %36, %c0_i32_18 : i32
      scf.if %37 {
        %cst_39 = arith.constant 0.000000e+00 : f32
        %73 = vector.broadcast %cst_39 : f32 to vector<2x256xf32>
        %c0_40 = arith.constant 0 : index
        %c0_41 = arith.constant 0 : index
        %74 = vector.load %arg10[%c0_40, %c0_41] : memref<2x256xf32, #tpu.memory_space<vmem>>, vector<2x256xf32>
        tpu.vector_store %arg10[%c0_40, %c0_41], %73 {strides = array<i32>} : memref<2x256xf32, #tpu.memory_space<vmem>>, vector<2x256xf32>,
      } else {
      }
      %c0_19 = arith.constant 0 : index
      %c0_20 = arith.constant 0 : index
      %38 = vector.load %arg9[%c0_19, %c0_20] : memref<2x128xf32, #tpu.memory_space<vmem>>, vector<1x128xf32>
      %39 = vector.broadcast %38 : vector<1x128xf32> to vector<128x128xf32>
      %40 = arith.mulf %28, %39 : vector<128x128xf32>
      %c1_21 = arith.constant 1 : index
      %c0_22 = arith.constant 0 : index
      %41 = vector.load %arg9[%c1_21, %c0_22] : memref<2x128xf32, #tpu.memory_space<vmem>>, vector<1x128xf32>
      %42 = vector.broadcast %41 : vector<1x128xf32> to vector<128x128xf32>
      %43 = arith.addf %40, %42 : vector<128x128xf32>
      %cst = arith.constant 0.000000e+00 : f32
      %44 = vector.broadcast %cst : f32 to vector<128x128xf32>
      %45 = arith.maximumf %43, %44 : vector<128x128xf32>
      %c128_i32 = arith.constant 128 : i32
      %46 = arith.muli %arg1, %c128_i32 : i32
      %47 = tpu.iota {dimensions = array<i32: 0>} : vector<128x1xi32>
      %48 = vector.broadcast %46 : i32 to vector<128x1xi32>
      %49 = arith.addi %48, %47 : vector<128x1xi32>
      %c8_i32 = arith.constant 8 : i32
      %50 = vector.broadcast %c8_i32 : i32 to vector<128x1xi32>
      %51 = arith.cmpi slt, %49, %50 : vector<128x1xi32>
      %cst_23 = arith.constant 0.000000e+00 : f32
      %52 = vector.shape_cast %51 : vector<128x1xi1> to vector<128x1xi1>
      %53 = vector.broadcast %52 : vector<128x1xi1> to vector<128x128xi1>
      %54 = vector.broadcast %cst_23 : f32 to vector<128x128xf32>
      %55 = arith.select %53, %45, %54 : vector<128x128xi1>, vector<128x128xf32>
      %56 = arith.truncf %55 : vector<128x128xf32> to vector<128x128xbf16>
      %c0_24 = arith.constant 0 : index
      %c0_25 = arith.constant 0 : index
      %57 = vector.load %arg6[%c0_24, %c0_25] : memref<128x256xbf16, #tpu.memory_space<vmem>>, vector<128x256xbf16>
      %cst_26 = arith.constant dense<0.000000e+00> : vector<128x256xf32>
      %58 = tpu.matmul %56, %57, %cst_26 {dimension_numbers = #tpu.dot_dimension_numbers<[1], [0], [0], [1], [0, 0, 1, 1], [], []>} : vector<128x128xbf16>, vector<128x256xbf16>, vector<128x256xf32> -> vector<128x256xf32>
      %c0_27 = arith.constant 0 : index
      %c0_28 = arith.constant 0 : index
      %59 = vector.load %arg10[%c0_27, %c0_28] : memref<2x256xf32, #tpu.memory_space<vmem>>, vector<1x256xf32>
      %cst_29 = arith.constant dense<0.000000e+00> : vector<256xf32>
      %60 = vector.multi_reduction <add>, %58, %cst_29 [0] : vector<128x256xf32> to vector<256xf32>
      %61 = vector.shape_cast %60 : vector<256xf32> to vector<1x256xf32>
      %62 = arith.addf %59, %61 : vector<1x256xf32>
      %c0_30 = arith.constant 0 : index
      %c0_31 = arith.constant 0 : index
      %63 = vector.load %arg10[%c0_30, %c0_31] : memref<2x256xf32, #tpu.memory_space<vmem>>, vector<1x256xf32>
      tpu.vector_store %arg10[%c0_30, %c0_31], %62 {strides = array<i32>} : memref<2x256xf32, #tpu.memory_space<vmem>>, vector<1x256xf32>,
      %c1_32 = arith.constant 1 : index
      %c0_33 = arith.constant 0 : index
      %64 = vector.load %arg10[%c1_32, %c0_33] : memref<2x256xf32, #tpu.memory_space<vmem>>, vector<1x256xf32>
      %65 = arith.mulf %58, %58 : vector<128x256xf32>
      %cst_34 = arith.constant dense<0.000000e+00> : vector<256xf32>
      %66 = vector.multi_reduction <add>, %65, %cst_34 [0] : vector<128x256xf32> to vector<256xf32>
      %67 = vector.shape_cast %66 : vector<256xf32> to vector<1x256xf32>
      %68 = arith.addf %64, %67 : vector<1x256xf32>
      %c1_35 = arith.constant 1 : index
      %c0_36 = arith.constant 0 : index
      %69 = vector.load %arg10[%c1_35, %c0_36] : memref<2x256xf32, #tpu.memory_space<vmem>>, vector<1x256xf32>
      tpu.vector_store %arg10[%c1_35, %c0_36], %68 {strides = array<i32>} : memref<2x256xf32, #tpu.memory_space<vmem>>, vector<1x256xf32>,
      %c0_i32_37 = arith.constant 0 : i32
      %70 = arith.cmpi eq, %arg1, %c0_i32_37 : i32
      %71 = arith.extui %70 : i1 to i32
      %c0_i32_38 = arith.constant 0 : i32
      %72 = arith.cmpi ne, %71, %c0_i32_38 : i32
      scf.if %72 {
        %c0_39 = arith.constant 0 : index
        %c0_40 = arith.constant 0 : index
        %73 = vector.load %arg10[%c0_39, %c0_40] : memref<2x256xf32, #tpu.memory_space<vmem>>, vector<1x256xf32>
        %cst_41 = arith.constant 1.250000e-01 : f32
        %74 = vector.broadcast %cst_41 : f32 to vector<1x256xf32>
        %75 = arith.mulf %73, %74 : vector<1x256xf32>
        %c1_42 = arith.constant 1 : index
        %c0_43 = arith.constant 0 : index
        %76 = vector.load %arg10[%c1_42, %c0_43] : memref<2x256xf32, #tpu.memory_space<vmem>>, vector<1x256xf32>
        %cst_44 = arith.constant 1.250000e-01 : f32
        %77 = vector.broadcast %cst_44 : f32 to vector<1x256xf32>
        %78 = arith.mulf %76, %77 : vector<1x256xf32>
        %79 = arith.mulf %75, %75 : vector<1x256xf32>
        %80 = arith.subf %78, %79 : vector<1x256xf32>
        %cst_45 = arith.constant 0.000000e+00 : f32
        %81 = vector.broadcast %cst_45 : f32 to vector<1x256xf32>
        %82 = arith.maximumf %80, %81 : vector<1x256xf32>
        %c0_46 = arith.constant 0 : index
        %c0_47 = arith.constant 0 : index
        %83 = vector.load %arg7[%c0_46, %c0_47] : memref<1x256xf32, #tpu.memory_space<vmem>>, vector<1x256xf32>
        %cst_48 = arith.constant 9.99999974E-6 : f32
        %84 = vector.broadcast %cst_48 : f32 to vector<1x256xf32>
        %85 = arith.addf %82, %84 : vector<1x256xf32>
        %86 = math.rsqrt %85 : vector<1x256xf32>
        %87 = arith.mulf %83, %86 : vector<1x256xf32>
        %c0_49 = arith.constant 0 : index
        %c0_50 = arith.constant 0 : index
        %88 = vector.load %arg8[%c0_49, %c0_50] : memref<1x256xf32, #tpu.memory_space<vmem>>, vector<1x256xf32>
        %89 = arith.mulf %75, %87 : vector<1x256xf32>
        %90 = arith.subf %88, %89 : vector<1x256xf32>
        %c0_51 = arith.constant 0 : index
        %c0_52 = arith.constant 0 : index
        %91 = vector.load %arg10[%c0_51, %c0_52] : memref<2x256xf32, #tpu.memory_space<vmem>>, vector<1x256xf32>
        tpu.vector_store %arg10[%c0_51, %c0_52], %87 {strides = array<i32>} : memref<2x256xf32, #tpu.memory_space<vmem>>, vector<1x256xf32>,
        %c1_53 = arith.constant 1 : index
        %c0_54 = arith.constant 0 : index
        %92 = vector.load %arg10[%c1_53, %c0_54] : memref<2x256xf32, #tpu.memory_space<vmem>>, vector<1x256xf32>
        tpu.vector_store %arg10[%c1_53, %c0_54], %90 {strides = array<i32>} : memref<2x256xf32, #tpu.memory_space<vmem>>, vector<1x256xf32>,
      } else {
      }
    } else {
    }
    return
  }
  func.func @transform_0(%arg0: i32, %arg1: i32) -> (i32, i32) {
    %c0_i32 = arith.constant 0 : i32
    %c0_i32_0 = arith.constant 0 : i32
    return %arg1, %c0_i32 : i32, i32
  }
  func.func @transform_1(%arg0: i32, %arg1: i32) -> (i32, i32) {
    %c0_i32 = arith.constant 0 : i32
    %c0_i32_0 = arith.constant 0 : i32
    %c0_i32_1 = arith.constant 0 : i32
    return %c0_i32, %c0_i32_0 : i32, i32
  }
  func.func @transform_2(%arg0: i32, %arg1: i32) -> (i32, i32) {
    %c0_i32 = arith.constant 0 : i32
    %c0_i32_0 = arith.constant 0 : i32
    %c0_i32_1 = arith.constant 0 : i32
    return %c0_i32, %c0_i32_0 : i32, i32
  }
  func.func @transform_3(%arg0: i32, %arg1: i32) -> (i32, i32) {
    %c0_i32 = arith.constant 0 : i32
    %c0_i32_0 = arith.constant 0 : i32
    %c0_i32_1 = arith.constant 0 : i32
    return %c0_i32, %c0_i32_0 : i32, i32
  }
  func.func @transform_4(%arg0: i32, %arg1: i32) -> (i32, i32) {
    %c0_i32 = arith.constant 0 : i32
    %c0_i32_0 = arith.constant 0 : i32
    %c0_i32_1 = arith.constant 0 : i32
    return %c0_i32, %c0_i32_0 : i32, i32
  }
  func.func @transform_5(%arg0: i32, %arg1: i32) -> (i32, i32) {
    %c0_i32 = arith.constant 0 : i32
    %c0_i32_0 = arith.constant 0 : i32
    %c0_i32_1 = arith.constant 0 : i32
    return %c0_i32, %c0_i32_0 : i32, i32
  }
  func.func @transform_6(%arg0: i32, %arg1: i32) -> (i32, i32) {
    %c0_i32 = arith.constant 0 : i32
    %c0_i32_0 = arith.constant 0 : i32
    %c0_i32_1 = arith.constant 0 : i32
    return %c0_i32, %c0_i32_0 : i32, i32
  }
  func.func @transform_7(%arg0: i32, %arg1: i32) -> (i32, i32) {
    %c0_i32 = arith.constant 0 : i32
    %c0_i32_0 = arith.constant 0 : i32
    %c0_i32_1 = arith.constant 0 : i32
    return %c0_i32, %c0_i32_0 : i32, i32
  }
  func.func @transform_8(%arg0: i32, %arg1: i32) -> (i32, i32) {
    %c0_i32 = arith.constant 0 : i32
    %c0_i32_0 = arith.constant 0 : i32
    %c0_i32_1 = arith.constant 0 : i32
    return %c0_i32, %c0_i32_0 : i32, i32
  }
}

</mosaic_0001>

<llo_original>
// kernel: tpu_custom_call.1
$region0: #{tpu_custom_call.1}
  #allocation0 [shape = 'u32[]', space=smem, size = 0x4, offset = 0x4, fixed_abs, tag = 'smem constant byte address 0x4 - core index']
  #allocation1 [shape = 'u32[72,128]{1,0:T(1,128)}', space=vmem, size = 0x9000, scoped, tag = 'internal scratch']
  %s0 = inlined_call_operand.vmem [shape: f32[128,8], index: 0, kind: input, shape index: {}]
  %s1 = inlined_call_operand.vmem [shape: f32[8,128], index: 1, kind: input, shape index: {}]
  %s2 = inlined_call_operand.vmem [shape: f32[1,128], index: 2, kind: input, shape index: {}]
  %s3 = inlined_call_operand.hbm [shape: f32[1,128], index: 3, kind: input, shape index: {}]
  %s4 = inlined_call_operand.vmem [shape: bf16[128,256], index: 4, kind: input, shape index: {}]
  %s5 = inlined_call_operand.vmem [shape: f32[1,256], index: 5, kind: input, shape index: {}]
  %s6 = inlined_call_operand.vmem [shape: f32[1,256], index: 6, kind: input, shape index: {}]
  %s7 = inlined_call_operand.hbm [shape: f32[2,128], index: 7, kind: output, shape index: {0}]
  %s8 = inlined_call_operand.hbm [shape: f32[2,256], index: 8, kind: output, shape index: {1}]
  %9 = xla_tuple %s7, %s8
  %s10 = sld [smem:[#allocation0]]
  $region97: #{tpu_custom_call.1} parent=0
    _
  %s12 = ssub.s32 1, %s10
  %s13 = scalar_select 0, %s12, %s10
  $region1: #{tpu_custom_call.1} parent=0
    #allocation2 [shape = 'u8[512]{0}', space=vmem, size = 0x400, scoped, tag = 'input window, operand 3, single buffered']
    #allocation3 [shape = 's32[2]{0}', space=sflag, size = 0x8, scoped, tag = 'scoped memory for tpu_custom_call.1']
    #allocation4 [shape = 's32[2]{0}', space=sflag, size = 0x8, scoped, tag = 'scoped memory for tpu_custom_call.1']
    #allocation5 [shape = 'u8[1024]{0}', space=vmem, size = 0x400, scoped, tag = 'output window, operand 0, single buffered']
    #allocation6 [shape = 'u8[2048]{0}', space=vmem, size = 0x800, scoped, tag = 'output window, operand 1, single buffered']
    #allocation7 [shape = 's32[1]{0}', space=sflag, size = 0x4, scoped, tag = 'scoped memory for tpu_custom_call.1']
    %14 = vsyncpa [#allocation3], 0
    %15 = vsyncpa [#allocation4], 0
    %16 = vsyncpa [#allocation7], 0
    loop: start=0, step=1, limit=4
    $region2: #{tpu_custom_call.1} parent=1 // loop_pre_header
      _
    $region3: #{tpu_custom_call.1} parent=1 // loop_header
      %s18 = sphi 0, %s22
      %p19 = scmp.ge.s32.totalorder %s18, 4
      %s25 = sphi 0, %s37
      %s26 = sphi 0, %s33
      %s27 = sphi 0, %s25
      %s28 = sphi 0, %s26
      %s29 = sphi 0, %s27
      %s30 = sphi 0, %s28
      %s40 = sphi 0, %s42
      %s43 = sphi 0, %s40
      %s44 = sphi 0, %s43
      %s60 = sphi 0, %s44
      %s64 = sphi 0, %s64
      %s66 = sphi 0, %s64
      %s67 = sphi 0, %s66
      %s81 = sphi 0, %s67
      %s85 = sphi 0, %s85
      %s87 = sphi 0, %s85
      %s88 = sphi 0, %s87
      %s102 = sphi 0, %s88
      %s106 = sphi 0, %s106
      %s108 = sphi 0, %s106
      %s109 = sphi 0, %s108
      %s123 = sphi 0, %s109
      %s127 = sphi 0, %s127
      %s129 = sphi 0, %s127
      %s130 = sphi 0, %s129
      %s144 = sphi 0, %s130
      %s148 = sphi 0, %s148
      %s150 = sphi 0, %s148
      %s151 = sphi 0, %s150
      %s165 = sphi 0, %s151
      %s169 = sphi 0, %s169
      %s171 = sphi 0, %s169
      %s172 = sphi 0, %s171
      %s186 = sphi 0, %s172
      %s190 = sphi 0, %s190
      %s192 = sphi 0, %s190
      %s193 = sphi 0, %s192
      %s207 = sphi 0, %s193
      %s211 = sphi 0, %s211
      %s213 = sphi 0, %s211
      %s214 = sphi 0, %s213
      %s228 = sphi 0, %s214
    $region4: #{tpu_custom_call.1} parent=1 // loop_header_branch
      %21 = sbr.rel (%p19) target = $region8
    $region5: #{tpu_custom_call.1} parent=1 // loop_body
      %s23 = ssub.s32 %s18, 1
      %s24 = ssub.s32 %s18, 2
      %s31 = sadd.s32 1, %s26
      %p32 = scmp.ge.s32.totalorder %s31, 1
      %s33 = scalar_select %p32, 0, %s31
      %s34 = sadd.s32 1, %s25
      %s35 = scalar_select %p32, %s34, %s25
      %p36 = scmp.ge.s32.totalorder %s35, 2
      %s37 = scalar_select %p36, 0, %s35
      %s38 = ssub.s32 %s26, %s33
      %p39 = scmp.eq.s32.totalorder %s38, 0
      %s41 = sadd.s32 %s40, 1
      %s42 = scalar_select %p39, %s40, %s41
      %p45 = pneg %p39
      %p46 = scmp.eq.s32.totalorder %s18, 1
      %p47 = por %p45, %p46
      %p48 = scmp.ne.s32.totalorder %s40, %s43
      %p49 = scmp.eq.s32.totalorder %s18, 0
      %p50 = por %p48, %p49
      %p51 = scmp.ne.s32.totalorder %s40, %s43
      %p52 = scmp.eq.s32.totalorder %s23, 1
      %p53 = por %p51, %p52
      %p54 = scmp.ne.s32.totalorder %s43, %s44
      %p55 = scmp.eq.s32.totalorder %s23, 0
      %p56 = por %p54, %p55
      %p57 = scmp.ne.s32.totalorder %s43, %s44
      %p58 = scmp.eq.s32.totalorder %s24, 1
      %p59 = por %p57, %p58
      %p61 = scmp.ne.s32.totalorder %s44, %s60
      %p62 = scmp.eq.s32.totalorder %s24, 0
      %p63 = por %p61, %p62
      %s65 = sadd.s32 %s64, 1
      %p68 = scmp.eq.s32.totalorder %s18, 1
      %p69 = scmp.ne.s32.totalorder %s64, %s66
      %p70 = scmp.eq.s32.totalorder %s18, 0
      %p71 = por %p69, %p70
      %p72 = scmp.ne.s32.totalorder %s64, %s66
      %p73 = scmp.eq.s32.totalorder %s23, 1
      %p74 = por %p72, %p73
      %p75 = scmp.ne.s32.totalorder %s66, %s67
      %p76 = scmp.eq.s32.totalorder %s23, 0
      %p77 = por %p75, %p76
      %p78 = scmp.ne.s32.totalorder %s66, %s67
      %p79 = scmp.eq.s32.totalorder %s24, 1
      %p80 = por %p78, %p79
      %p82 = scmp.ne.s32.totalorder %s67, %s81
      %p83 = scmp.eq.s32.totalorder %s24, 0
      %p84 = por %p82, %p83
      %s86 = sadd.s32 %s85, 1
      %p89 = scmp.eq.s32.totalorder %s18, 1
      %p90 = scmp.ne.s32.totalorder %s85, %s87
      %p91 = scmp.eq.s32.totalorder %s18, 0
      %p92 = por %p90, %p91
      %p93 = scmp.ne.s32.totalorder %s85, %s87
      %p94 = scmp.eq.s32.totalorder %s23, 1
      %p95 = por %p93, %p94
      %p96 = scmp.ne.s32.totalorder %s87, %s88
      %p97 = scmp.eq.s32.totalorder %s23, 0
      %p98 = por %p96, %p97
      %p99 = scmp.ne.s32.totalorder %s87, %s88
      %p100 = scmp.eq.s32.totalorder %s24, 1
      %p101 = por %p99, %p100
      %p103 = scmp.ne.s32.totalorder %s88, %s102
      %p104 = scmp.eq.s32.totalorder %s24, 0
      %p105 = por %p103, %p104
      %s107 = sadd.s32 %s106, 1
      %p110 = scmp.eq.s32.totalorder %s18, 1
      %p111 = scmp.ne.s32.totalorder %s106, %s108
      %p112 = scmp.eq.s32.totalorder %s18, 0
      %p113 = por %p111, %p112
      %p114 = scmp.ne.s32.totalorder %s106, %s108
      %p115 = scmp.eq.s32.totalorder %s23, 1
      %p116 = por %p114, %p115
      %p117 = scmp.ne.s32.totalorder %s108, %s109
      %p118 = scmp.eq.s32.totalorder %s23, 0
      %p119 = por %p117, %p118
      %p120 = scmp.ne.s32.totalorder %s108, %s109
      %p121 = scmp.eq.s32.totalorder %s24, 1
      %p122 = por %p120, %p121
      %p124 = scmp.ne.s32.totalorder %s109, %s123
      %p125 = scmp.eq.s32.totalorder %s24, 0
      %p126 = por %p124, %p125
      %s128 = sadd.s32 %s127, 1
      %p131 = scmp.eq.s32.totalorder %s18, 1
      %p132 = scmp.ne.s32.totalorder %s127, %s129
      %p133 = scmp.eq.s32.totalorder %s18, 0
      %p134 = por %p132, %p133
      %p135 = scmp.ne.s32.totalorder %s127, %s129
      %p136 = scmp.eq.s32.totalorder %s23, 1
      %p137 = por %p135, %p136
      %p138 = scmp.ne.s32.totalorder %s129, %s130
      %p139 = scmp.eq.s32.totalorder %s23, 0
      %p140 = por %p138, %p139
      %p141 = scmp.ne.s32.totalorder %s129, %s130
      %p142 = scmp.eq.s32.totalorder %s24, 1
      %p143 = por %p141, %p142
      %p145 = scmp.ne.s32.totalorder %s130, %s144
      %p146 = scmp.eq.s32.totalorder %s24, 0
      %p147 = por %p145, %p146
      %s149 = sadd.s32 %s148, 1
      %p152 = scmp.eq.s32.totalorder %s18, 1
      %p153 = scmp.ne.s32.totalorder %s148, %s150
      %p154 = scmp.eq.s32.totalorder %s18, 0
      %p155 = por %p153, %p154
      %p156 = scmp.ne.s32.totalorder %s148, %s150
      %p157 = scmp.eq.s32.totalorder %s23, 1
      %p158 = por %p156, %p157
      %p159 = scmp.ne.s32.totalorder %s150, %s151
      %p160 = scmp.eq.s32.totalorder %s23, 0
      %p161 = por %p159, %p160
      %p162 = scmp.ne.s32.totalorder %s150, %s151
      %p163 = scmp.eq.s32.totalorder %s24, 1
      %p164 = por %p162, %p163
      %p166 = scmp.ne.s32.totalorder %s151, %s165
      %p167 = scmp.eq.s32.totalorder %s24, 0
      %p168 = por %p166, %p167
      %s170 = sadd.s32 %s169, 1
      %p173 = scmp.eq.s32.totalorder %s18, 1
      %p174 = scmp.ne.s32.totalorder %s169, %s171
      %p175 = scmp.eq.s32.totalorder %s18, 0
      %p176 = por %p174, %p175
      %p177 = scmp.ne.s32.totalorder %s169, %s171
      %p178 = scmp.eq.s32.totalorder %s23, 1
      %p179 = por %p177, %p178
      %p180 = scmp.ne.s32.totalorder %s171, %s172
      %p181 = scmp.eq.s32.totalorder %s23, 0
      %p182 = por %p180, %p181
      %p183 = scmp.ne.s32.totalorder %s171, %s172
      %p184 = scmp.eq.s32.totalorder %s24, 1
      %p185 = por %p183, %p184
      %p187 = scmp.ne.s32.totalorder %s172, %s186
      %p188 = scmp.eq.s32.totalorder %s24, 0
      %p189 = por %p187, %p188
      %s191 = sadd.s32 %s190, 1
      %p194 = scmp.eq.s32.totalorder %s18, 1
      %p195 = scmp.ne.s32.totalorder %s190, %s192
      %p196 = scmp.eq.s32.totalorder %s18, 0
      %p197 = por %p195, %p196
      %p198 = scmp.ne.s32.totalorder %s190, %s192
      %p199 = scmp.eq.s32.totalorder %s23, 1
      %p200 = por %p198, %p199
      %p201 = scmp.ne.s32.totalorder %s192, %s193
      %p202 = scmp.eq.s32.totalorder %s23, 0
      %p203 = por %p201, %p202
      %p204 = scmp.ne.s32.totalorder %s192, %s193
      %p205 = scmp.eq.s32.totalorder %s24, 1
      %p206 = por %p204, %p205
      %p208 = scmp.ne.s32.totalorder %s193, %s207
      %p209 = scmp.eq.s32.totalorder %s24, 0
      %p210 = por %p208, %p209
      %s212 = sadd.s32 %s211, 1
      %p215 = scmp.eq.s32.totalorder %s18, 1
      %p216 = scmp.ne.s32.totalorder %s211, %s213
      %p217 = scmp.eq.s32.totalorder %s18, 0
      %p218 = por %p216, %p217
      %p219 = scmp.ne.s32.totalorder %s211, %s213
      %p220 = scmp.eq.s32.totalorder %s23, 1
      %p221 = por %p219, %p220
      %p222 = scmp.ne.s32.totalorder %s213, %s214
      %p223 = scmp.eq.s32.totalorder %s23, 0
      %p224 = por %p222, %p223
      %p225 = scmp.ne.s32.totalorder %s213, %s214
      %p226 = scmp.eq.s32.totalorder %s24, 1
      %p227 = por %p225, %p226
      %p229 = scmp.ne.s32.totalorder %s214, %s228
      %p230 = scmp.eq.s32.totalorder %s24, 0
      %p231 = por %p229, %p230
      %p232 = scmp.le.s32.totalorder 1, %s18
      %p233 = scmp.lt.s32.totalorder %s18, 3
      %p234 = pnand %p232, %p233
      %p235 = pneg %p234
      // Predicated region
      $region9: #{tpu_custom_call.1} parent=5 // pred_check
        _
      $region10: #{tpu_custom_call.1} parent=5 // pred_check_branch
        %237 = sbr.rel (%p234) target = $region12
      $region11: #{tpu_custom_call.1} parent=5 // pred_region
        %s238 = ssub.s32 %s18, 1
        // Predicated region
        $region13: #{tpu_custom_call.1} parent=11 // pred_check
          %p239 = pneg %p56
        $region14: #{tpu_custom_call.1} parent=11 // pred_check_branch
          %241 = sbr.rel (%p239) target = $region16
        $region15: #{tpu_custom_call.1} parent=11 // pred_region
          %s242 = smul.u32 16, %s28
          %p243 = scmp.lt.s32.totalorder %s242, 15
          %s244 = scalar_select %p243, %s242, 15
          %s245 = smul.addr %s244, 8
          %s246 = scalar_lea.vmem %s0, %s245
          %s247 = smul.u32 16, %s28
        $region16: #{tpu_custom_call.1} parent=11 // pred_fallthru
          _
        // Predicated region
        $region17: #{tpu_custom_call.1} parent=11 // pred_check
          %p248 = pneg %p77
        $region18: #{tpu_custom_call.1} parent=11 // pred_check_branch
          %250 = sbr.rel (%p248) target = $region20
        $region19: #{tpu_custom_call.1} parent=11 // pred_region
          _
        $region20: #{tpu_custom_call.1} parent=11 // pred_fallthru
          _
        // Predicated region
        $region21: #{tpu_custom_call.1} parent=11 // pred_check
          %p251 = pneg %p98
        $region22: #{tpu_custom_call.1} parent=11 // pred_check_branch
          %253 = sbr.rel (%p251) target = $region24
        $region23: #{tpu_custom_call.1} parent=11 // pred_region
          _
        $region24: #{tpu_custom_call.1} parent=11 // pred_fallthru
          _
        // Predicated region
        $region25: #{tpu_custom_call.1} parent=11 // pred_check
          %p254 = pneg %p119
        $region26: #{tpu_custom_call.1} parent=11 // pred_check_branch
          %256 = sbr.rel (%p254) target = $region28
        $region27: #{tpu_custom_call.1} parent=11 // pred_region
          %258 = vsyncadd [#allocation3], 0
          %s260 = sshll.u32 %s3, 4
          %s261 = int_to_ptr.hbm [resolvable:$true] %s260
          %s262 = sshll.u32 [#allocation2], 4
          %s263 = int_to_ptr.vmem [resolvable:$true] %s262
          %265 = dma.hbm_to_vmem [thread:$0]  %s261, 16, %s263, [#allocation3]
        $region28: #{tpu_custom_call.1} parent=11 // pred_fallthru
          _
        // Predicated region
        $region29: #{tpu_custom_call.1} parent=11 // pred_check
          %p266 = pneg %p140
        $region30: #{tpu_custom_call.1} parent=11 // pred_check_branch
          %268 = sbr.rel (%p266) target = $region32
        $region31: #{tpu_custom_call.1} parent=11 // pred_region
          _
        $region32: #{tpu_custom_call.1} parent=11 // pred_fallthru
          _
        // Predicated region
        $region33: #{tpu_custom_call.1} parent=11 // pred_check
          %p269 = pneg %p161
        $region34: #{tpu_custom_call.1} parent=11 // pred_check_branch
          %271 = sbr.rel (%p269) target = $region36
        $region35: #{tpu_custom_call.1} parent=11 // pred_region
          _
        $region36: #{tpu_custom_call.1} parent=11 // pred_fallthru
          _
        // Predicated region
        $region37: #{tpu_custom_call.1} parent=11 // pred_check
          %p272 = pneg %p182
        $region38: #{tpu_custom_call.1} parent=11 // pred_check_branch
          %274 = sbr.rel (%p272) target = $region40
        $region39: #{tpu_custom_call.1} parent=11 // pred_region
          _
        $region40: #{tpu_custom_call.1} parent=11 // pred_fallthru
          _
      $region12: #{tpu_custom_call.1} parent=5 // pred_fallthru
        _
      %p275 = scmp.lt.s32.totalorder %s18, 2
      // Predicated region
      $region41: #{tpu_custom_call.1} parent=5 // pred_check
        %p276 = pneg %p275
      $region42: #{tpu_custom_call.1} parent=5 // pred_check_branch
        %278 = sbr.rel (%p276) target = $region44
      $region43: #{tpu_custom_call.1} parent=5 // pred_region
        _
      $region44: #{tpu_custom_call.1} parent=5 // pred_fallthru
        _
      %p279 = scmp.le.s32.totalorder 1, %s18
      %p280 = scmp.lt.s32.totalorder %s18, 3
      %p281 = pnand %p279, %p280
      %p282 = pneg %p281
      // Predicated region
      $region45: #{tpu_custom_call.1} parent=5 // pred_check
        _
      $region46: #{tpu_custom_call.1} parent=5 // pred_check_branch
        %284 = sbr.rel (%p281) target = $region48
      $region47: #{tpu_custom_call.1} parent=5 // pred_region
        %s285 = ssub.s32 %s18, 1
        // Predicated region
        $region49: #{tpu_custom_call.1} parent=47 // pred_check
          %p286 = pneg %p119
        $region50: #{tpu_custom_call.1} parent=47 // pred_check_branch
          %288 = sbr.rel (%p286) target = $region52
        $region51: #{tpu_custom_call.1} parent=47 // pred_region
          %290 = dma.done [#allocation3], 16
        $region52: #{tpu_custom_call.1} parent=47 // pred_fallthru
          _
        %s291 = smul.u32 16, %s28
        %p292 = scmp.lt.s32.totalorder %s291, 15
        %s293 = scalar_select %p292, %s291, 15
        %s294 = smul.addr %s293, 8
        %s295 = scalar_lea.vmem %s0, %s294
        %p296 = pneg %p56
        %p297 = pneg %p53
        %p298 = pneg %p77
        %p299 = pneg %p74
        %p300 = pneg %p98
        %p301 = pneg %p95
        %p302 = pneg %p119
        %p303 = pneg %p116
        %p304 = pneg %p140
        %p305 = pneg %p137
        %p306 = pneg %p161
        %p307 = pneg %p158
        %p308 = pneg %p182
        %p309 = pneg %p179
        %p310 = pneg %p203
        %p311 = pneg %p200
        %p312 = pneg %p224
        %p313 = pneg %p221
        %s314 = smul.u32 16, %s28
        %p315 = scmp.lt.s32.totalorder %s314, 15
        %s316 = scalar_select %p315, %s314, 15
        %s317 = smul.addr %s316, 8
        %s318 = scalar_lea.vmem %s0, %s317
        %s319 = smul.u32 16, %s28
        %v320 = vld [vmem:[%s318] sm:$0xff]
        %v321 = vld [vmem:[%s318 + $0x8] sm:$0xff]
        %v322 = vld [vmem:[%s318 + $0x10] sm:$0xff]
        %v323 = vld [vmem:[%s318 + $0x18] sm:$0xff]
        %v324 = vld [vmem:[%s318 + $0x20] sm:$0xff]
        %v325 = vld [vmem:[%s318 + $0x28] sm:$0xff]
        %v326 = vld [vmem:[%s318 + $0x30] sm:$0xff]
        %v327 = vld [vmem:[%s318 + $0x38] sm:$0xff]
        %v328 = vld [vmem:[%s318 + $0x40] sm:$0xff]
        %v329 = vld [vmem:[%s318 + $0x48] sm:$0xff]
        %v330 = vld [vmem:[%s318 + $0x50] sm:$0xff]
        %v331 = vld [vmem:[%s318 + $0x58] sm:$0xff]
        %v332 = vld [vmem:[%s318 + $0x60] sm:$0xff]
        %v333 = vld [vmem:[%s318 + $0x68] sm:$0xff]
        %v334 = vld [vmem:[%s318 + $0x70] sm:$0xff]
        %v335 = vld [vmem:[%s318 + $0x78] sm:$0xff]
        %v336 = vld [vmem:[%s1] sm:$0x1]
        %338 = vset.pattern.permute.xlu0 0
        %339 = vperm.xlu0 %338, %v320
        %v340 = vpop.permute.xlu0 %339
        %343 = vset.pattern.permute.xlu0 0
        %344 = vperm.xlu0 %343, %v321
        %v345 = vpop.permute.xlu0 %344
        %348 = vset.pattern.permute.xlu0 0
        %349 = vperm.xlu0 %348, %v322
        %v350 = vpop.permute.xlu0 %349
        %353 = vset.pattern.permute.xlu0 0
        %354 = vperm.xlu0 %353, %v323
        %v355 = vpop.permute.xlu0 %354
        %358 = vset.pattern.permute.xlu0 0
        %359 = vperm.xlu0 %358, %v324
        %v360 = vpop.permute.xlu0 %359
        %363 = vset.pattern.permute.xlu0 0
        %364 = vperm.xlu0 %363, %v325
        %v365 = vpop.permute.xlu0 %364
        %368 = vset.pattern.permute.xlu0 0
        %369 = vperm.xlu0 %368, %v326
        %v370 = vpop.permute.xlu0 %369
        %373 = vset.pattern.permute.xlu0 0
        %374 = vperm.xlu0 %373, %v327
        %v375 = vpop.permute.xlu0 %374
        %378 = vset.pattern.permute.xlu0 0
        %379 = vperm.xlu0 %378, %v328
        %v380 = vpop.permute.xlu0 %379
        %383 = vset.pattern.permute.xlu0 0
        %384 = vperm.xlu0 %383, %v329
        %v385 = vpop.permute.xlu0 %384
        %388 = vset.pattern.permute.xlu0 0
        %389 = vperm.xlu0 %388, %v330
        %v390 = vpop.permute.xlu0 %389
        %393 = vset.pattern.permute.xlu0 0
        %394 = vperm.xlu0 %393, %v331
        %v395 = vpop.permute.xlu0 %394
        %398 = vset.pattern.permute.xlu0 0
        %399 = vperm.xlu0 %398, %v332
        %v400 = vpop.permute.xlu0 %399
        %403 = vset.pattern.permute.xlu0 0
        %404 = vperm.xlu0 %403, %v333
        %v405 = vpop.permute.xlu0 %404
        %408 = vset.pattern.permute.xlu0 0
        %409 = vperm.xlu0 %408, %v334
        %v410 = vpop.permute.xlu0 %409
        %413 = vset.pattern.permute.xlu0 0
        %414 = vperm.xlu0 %413, %v335
        %v415 = vpop.permute.xlu0 %414
        %v417 = vperm.slane %v336, 0
        %v418 = vmul.f32 %v340, %v417
        %v419 = vmul.f32 %v345, %v417
        %v420 = vmul.f32 %v350, %v417
        %v421 = vmul.f32 %v355, %v417
        %v422 = vmul.f32 %v360, %v417
        %v423 = vmul.f32 %v365, %v417
        %v424 = vmul.f32 %v370, %v417
        %v425 = vmul.f32 %v375, %v417
        %v426 = vmul.f32 %v380, %v417
        %v427 = vmul.f32 %v385, %v417
        %v428 = vmul.f32 %v390, %v417
        %v429 = vmul.f32 %v395, %v417
        %v430 = vmul.f32 %v400, %v417
        %v431 = vmul.f32 %v405, %v417
        %v432 = vmul.f32 %v410, %v417
        %v433 = vmul.f32 %v415, %v417
        %v434 = vld [vmem:[%s1 + $0x1] sm:$0x1]
        %435 = vset.pattern.permute.xlu0 1
        %436 = vperm.xlu0 %435, %v320
        %v437 = vpop.permute.xlu0 %436
        %439 = vset.pattern.permute.xlu0 1
        %440 = vperm.xlu0 %439, %v321
        %v441 = vpop.permute.xlu0 %440
        %443 = vset.pattern.permute.xlu0 1
        %444 = vperm.xlu0 %443, %v322
        %v445 = vpop.permute.xlu0 %444
        %447 = vset.pattern.permute.xlu0 1
        %448 = vperm.xlu0 %447, %v323
        %v449 = vpop.permute.xlu0 %448
        %451 = vset.pattern.permute.xlu0 1
        %452 = vperm.xlu0 %451, %v324
        %v453 = vpop.permute.xlu0 %452
        %455 = vset.pattern.permute.xlu0 1
        %456 = vperm.xlu0 %455, %v325
        %v457 = vpop.permute.xlu0 %456
        %459 = vset.pattern.permute.xlu0 1
        %460 = vperm.xlu0 %459, %v326
        %v461 = vpop.permute.xlu0 %460
        %463 = vset.pattern.permute.xlu0 1
        %464 = vperm.xlu0 %463, %v327
        %v465 = vpop.permute.xlu0 %464
        %467 = vset.pattern.permute.xlu0 1
        %468 = vperm.xlu0 %467, %v328
        %v469 = vpop.permute.xlu0 %468
        %471 = vset.pattern.permute.xlu0 1
        %472 = vperm.xlu0 %471, %v329
        %v473 = vpop.permute.xlu0 %472
        %475 = vset.pattern.permute.xlu0 1
        %476 = vperm.xlu0 %475, %v330
        %v477 = vpop.permute.xlu0 %476
        %479 = vset.pattern.permute.xlu0 1
        %480 = vperm.xlu0 %479, %v331
        %v481 = vpop.permute.xlu0 %480
        %483 = vset.pattern.permute.xlu0 1
        %484 = vperm.xlu0 %483, %v332
        %v485 = vpop.permute.xlu0 %484
        %487 = vset.pattern.permute.xlu0 1
        %488 = vperm.xlu0 %487, %v333
        %v489 = vpop.permute.xlu0 %488
        %491 = vset.pattern.permute.xlu0 1
        %492 = vperm.xlu0 %491, %v334
        %v493 = vpop.permute.xlu0 %492
        %495 = vset.pattern.permute.xlu0 1
        %496 = vperm.xlu0 %495, %v335
        %v497 = vpop.permute.xlu0 %496
        %v499 = vperm.slane %v434, 0
        %v500 = vmul.f32 %v437, %v499
        %v501 = vmul.f32 %v441, %v499
        %v502 = vmul.f32 %v445, %v499
        %v503 = vmul.f32 %v449, %v499
        %v504 = vmul.f32 %v453, %v499
        %v505 = vmul.f32 %v457, %v499
        %v506 = vmul.f32 %v461, %v499
        %v507 = vmul.f32 %v465, %v499
        %v508 = vmul.f32 %v469, %v499
        %v509 = vmul.f32 %v473, %v499
        %v510 = vmul.f32 %v477, %v499
        %v511 = vmul.f32 %v481, %v499
        %v512 = vmul.f32 %v485, %v499
        %v513 = vmul.f32 %v489, %v499
        %v514 = vmul.f32 %v493, %v499
        %v515 = vmul.f32 %v497, %v499
        %v516 = vadd.f32 %v418, %v500
        %v517 = vadd.f32 %v419, %v501
        %v518 = vadd.f32 %v420, %v502
        %v519 = vadd.f32 %v421, %v503
        %v520 = vadd.f32 %v422, %v504
        %v521 = vadd.f32 %v423, %v505
        %v522 = vadd.f32 %v424, %v506
        %v523 = vadd.f32 %v425, %v507
        %v524 = vadd.f32 %v426, %v508
        %v525 = vadd.f32 %v427, %v509
        %v526 = vadd.f32 %v428, %v510
        %v527 = vadd.f32 %v429, %v511
        %v528 = vadd.f32 %v430, %v512
        %v529 = vadd.f32 %v431, %v513
        %v530 = vadd.f32 %v432, %v514
        %v531 = vadd.f32 %v433, %v515
        %v532 = vld [vmem:[%s1 + $0x2] sm:$0x1]
        %533 = vset.pattern.permute.xlu0 2
        %534 = vperm.xlu0 %533, %v320
        %v535 = vpop.permute.xlu0 %534
        %537 = vset.pattern.permute.xlu0 2
        %538 = vperm.xlu0 %537, %v321
        %v539 = vpop.permute.xlu0 %538
        %541 = vset.pattern.permute.xlu0 2
        %542 = vperm.xlu0 %541, %v322
        %v543 = vpop.permute.xlu0 %542
        %545 = vset.pattern.permute.xlu0 2
        %546 = vperm.xlu0 %545, %v323
        %v547 = vpop.permute.xlu0 %546
        %549 = vset.pattern.permute.xlu0 2
        %550 = vperm.xlu0 %549, %v324
        %v551 = vpop.permute.xlu0 %550
        %553 = vset.pattern.permute.xlu0 2
        %554 = vperm.xlu0 %553, %v325
        %v555 = vpop.permute.xlu0 %554
        %557 = vset.pattern.permute.xlu0 2
        %558 = vperm.xlu0 %557, %v326
        %v559 = vpop.permute.xlu0 %558
        %561 = vset.pattern.permute.xlu0 2
        %562 = vperm.xlu0 %561, %v327
        %v563 = vpop.permute.xlu0 %562
        %565 = vset.pattern.permute.xlu0 2
        %566 = vperm.xlu0 %565, %v328
        %v567 = vpop.permute.xlu0 %566
        %569 = vset.pattern.permute.xlu0 2
        %570 = vperm.xlu0 %569, %v329
        %v571 = vpop.permute.xlu0 %570
        %573 = vset.pattern.permute.xlu0 2
        %574 = vperm.xlu0 %573, %v330
        %v575 = vpop.permute.xlu0 %574
        %577 = vset.pattern.permute.xlu0 2
        %578 = vperm.xlu0 %577, %v331
        %v579 = vpop.permute.xlu0 %578
        %581 = vset.pattern.permute.xlu0 2
        %582 = vperm.xlu0 %581, %v332
        %v583 = vpop.permute.xlu0 %582
        %585 = vset.pattern.permute.xlu0 2
        %586 = vperm.xlu0 %585, %v333
        %v587 = vpop.permute.xlu0 %586
        %589 = vset.pattern.permute.xlu0 2
        %590 = vperm.xlu0 %589, %v334
        %v591 = vpop.permute.xlu0 %590
        %593 = vset.pattern.permute.xlu0 2
        %594 = vperm.xlu0 %593, %v335
        %v595 = vpop.permute.xlu0 %594
        %v597 = vperm.slane %v532, 0
        %v598 = vmul.f32 %v535, %v597
        %v599 = vmul.f32 %v539, %v597
        %v600 = vmul.f32 %v543, %v597
        %v601 = vmul.f32 %v547, %v597
        %v602 = vmul.f32 %v551, %v597
        %v603 = vmul.f32 %v555, %v597
        %v604 = vmul.f32 %v559, %v597
        %v605 = vmul.f32 %v563, %v597
        %v606 = vmul.f32 %v567, %v597
        %v607 = vmul.f32 %v571, %v597
        %v608 = vmul.f32 %v575, %v597
        %v609 = vmul.f32 %v579, %v597
        %v610 = vmul.f32 %v583, %v597
        %v611 = vmul.f32 %v587, %v597
        %v612 = vmul.f32 %v591, %v597
        %v613 = vmul.f32 %v595, %v597
        %v614 = vadd.f32 %v516, %v598
        %v615 = vadd.f32 %v517, %v599
        %v616 = vadd.f32 %v518, %v600
        %v617 = vadd.f32 %v519, %v601
        %v618 = vadd.f32 %v520, %v602
        %v619 = vadd.f32 %v521, %v603
        %v620 = vadd.f32 %v522, %v604
        %v621 = vadd.f32 %v523, %v605
        %v622 = vadd.f32 %v524, %v606
        %v623 = vadd.f32 %v525, %v607
        %v624 = vadd.f32 %v526, %v608
        %v625 = vadd.f32 %v527, %v609
        %v626 = vadd.f32 %v528, %v610
        %v627 = vadd.f32 %v529, %v611
        %v628 = vadd.f32 %v530, %v612
        %v629 = vadd.f32 %v531, %v613
        %v630 = vld [vmem:[%s1 + $0x3] sm:$0x1]
        %631 = vset.pattern.permute.xlu0 3
        %632 = vperm.xlu0 %631, %v320
        %v633 = vpop.permute.xlu0 %632
        %635 = vset.pattern.permute.xlu0 3
        %636 = vperm.xlu0 %635, %v321
        %v637 = vpop.permute.xlu0 %636
        %639 = vset.pattern.permute.xlu0 3
        %640 = vperm.xlu0 %639, %v322
        %v641 = vpop.permute.xlu0 %640
        %643 = vset.pattern.permute.xlu0 3
        %644 = vperm.xlu0 %643, %v323
        %v645 = vpop.permute.xlu0 %644
        %647 = vset.pattern.permute.xlu0 3
        %648 = vperm.xlu0 %647, %v324
        %v649 = vpop.permute.xlu0 %648
        %651 = vset.pattern.permute.xlu0 3
        %652 = vperm.xlu0 %651, %v325
        %v653 = vpop.permute.xlu0 %652
        %655 = vset.pattern.permute.xlu0 3
        %656 = vperm.xlu0 %655, %v326
        %v657 = vpop.permute.xlu0 %656
        %659 = vset.pattern.permute.xlu0 3
        %660 = vperm.xlu0 %659, %v327
        %v661 = vpop.permute.xlu0 %660
        %663 = vset.pattern.permute.xlu0 3
        %664 = vperm.xlu0 %663, %v328
        %v665 = vpop.permute.xlu0 %664
        %667 = vset.pattern.permute.xlu0 3
        %668 = vperm.xlu0 %667, %v329
        %v669 = vpop.permute.xlu0 %668
        %671 = vset.pattern.permute.xlu0 3
        %672 = vperm.xlu0 %671, %v330
        %v673 = vpop.permute.xlu0 %672
        %675 = vset.pattern.permute.xlu0 3
        %676 = vperm.xlu0 %675, %v331
        %v677 = vpop.permute.xlu0 %676
        %679 = vset.pattern.permute.xlu0 3
        %680 = vperm.xlu0 %679, %v332
        %v681 = vpop.permute.xlu0 %680
        %683 = vset.pattern.permute.xlu0 3
        %684 = vperm.xlu0 %683, %v333
        %v685 = vpop.permute.xlu0 %684
        %687 = vset.pattern.permute.xlu0 3
        %688 = vperm.xlu0 %687, %v334
        %v689 = vpop.permute.xlu0 %688
        %691 = vset.pattern.permute.xlu0 3
        %692 = vperm.xlu0 %691, %v335
        %v693 = vpop.permute.xlu0 %692
        %v695 = vperm.slane %v630, 0
        %v696 = vmul.f32 %v633, %v695
        %v697 = vmul.f32 %v637, %v695
        %v698 = vmul.f32 %v641, %v695
        %v699 = vmul.f32 %v645, %v695
        %v700 = vmul.f32 %v649, %v695
        %v701 = vmul.f32 %v653, %v695
        %v702 = vmul.f32 %v657, %v695
        %v703 = vmul.f32 %v661, %v695
        %v704 = vmul.f32 %v665, %v695
        %v705 = vmul.f32 %v669, %v695
        %v706 = vmul.f32 %v673, %v695
        %v707 = vmul.f32 %v677, %v695
        %v708 = vmul.f32 %v681, %v695
        %v709 = vmul.f32 %v685, %v695
        %v710 = vmul.f32 %v689, %v695
        %v711 = vmul.f32 %v693, %v695
        %v712 = vadd.f32 %v614, %v696
        %v713 = vadd.f32 %v615, %v697
        %v714 = vadd.f32 %v616, %v698
        %v715 = vadd.f32 %v617, %v699
        %v716 = vadd.f32 %v618, %v700
        %v717 = vadd.f32 %v619, %v701
        %v718 = vadd.f32 %v620, %v702
        %v719 = vadd.f32 %v621, %v703
        %v720 = vadd.f32 %v622, %v704
        %v721 = vadd.f32 %v623, %v705
        %v722 = vadd.f32 %v624, %v706
        %v723 = vadd.f32 %v625, %v707
        %v724 = vadd.f32 %v626, %v708
        %v725 = vadd.f32 %v627, %v709
        %v726 = vadd.f32 %v628, %v710
        %v727 = vadd.f32 %v629, %v711
        %v728 = vld [vmem:[%s1 + $0x4] sm:$0x1]
        %729 = vset.pattern.permute.xlu0 4
        %730 = vperm.xlu0 %729, %v320
        %v731 = vpop.permute.xlu0 %730
        %733 = vset.pattern.permute.xlu0 4
        %734 = vperm.xlu0 %733, %v321
        %v735 = vpop.permute.xlu0 %734
        %737 = vset.pattern.permute.xlu0 4
        %738 = vperm.xlu0 %737, %v322
        %v739 = vpop.permute.xlu0 %738
        %741 = vset.pattern.permute.xlu0 4
        %742 = vperm.xlu0 %741, %v323
        %v743 = vpop.permute.xlu0 %742
        %745 = vset.pattern.permute.xlu0 4
        %746 = vperm.xlu0 %745, %v324
        %v747 = vpop.permute.xlu0 %746
        %749 = vset.pattern.permute.xlu0 4
        %750 = vperm.xlu0 %749, %v325
        %v751 = vpop.permute.xlu0 %750
        %753 = vset.pattern.permute.xlu0 4
        %754 = vperm.xlu0 %753, %v326
        %v755 = vpop.permute.xlu0 %754
        %757 = vset.pattern.permute.xlu0 4
        %758 = vperm.xlu0 %757, %v327
        %v759 = vpop.permute.xlu0 %758
        %761 = vset.pattern.permute.xlu0 4
        %762 = vperm.xlu0 %761, %v328
        %v763 = vpop.permute.xlu0 %762
        %765 = vset.pattern.permute.xlu0 4
        %766 = vperm.xlu0 %765, %v329
        %v767 = vpop.permute.xlu0 %766
        %769 = vset.pattern.permute.xlu0 4
        %770 = vperm.xlu0 %769, %v330
        %v771 = vpop.permute.xlu0 %770
        %773 = vset.pattern.permute.xlu0 4
        %774 = vperm.xlu0 %773, %v331
        %v775 = vpop.permute.xlu0 %774
        %777 = vset.pattern.permute.xlu0 4
        %778 = vperm.xlu0 %777, %v332
        %v779 = vpop.permute.xlu0 %778
        %781 = vset.pattern.permute.xlu0 4
        %782 = vperm.xlu0 %781, %v333
        %v783 = vpop.permute.xlu0 %782
        %785 = vset.pattern.permute.xlu0 4
        %786 = vperm.xlu0 %785, %v334
        %v787 = vpop.permute.xlu0 %786
        %789 = vset.pattern.permute.xlu0 4
        %790 = vperm.xlu0 %789, %v335
        %v791 = vpop.permute.xlu0 %790
        %v793 = vperm.slane %v728, 0
        %v794 = vmul.f32 %v731, %v793
        %v795 = vmul.f32 %v735, %v793
        %v796 = vmul.f32 %v739, %v793
        %v797 = vmul.f32 %v743, %v793
        %v798 = vmul.f32 %v747, %v793
        %v799 = vmul.f32 %v751, %v793
        %v800 = vmul.f32 %v755, %v793
        %v801 = vmul.f32 %v759, %v793
        %v802 = vmul.f32 %v763, %v793
        %v803 = vmul.f32 %v767, %v793
        %v804 = vmul.f32 %v771, %v793
        %v805 = vmul.f32 %v775, %v793
        %v806 = vmul.f32 %v779, %v793
        %v807 = vmul.f32 %v783, %v793
        %v808 = vmul.f32 %v787, %v793
        %v809 = vmul.f32 %v791, %v793
        %v810 = vadd.f32 %v712, %v794
        %v811 = vadd.f32 %v713, %v795
        %v812 = vadd.f32 %v714, %v796
        %v813 = vadd.f32 %v715, %v797
        %v814 = vadd.f32 %v716, %v798
        %v815 = vadd.f32 %v717, %v799
        %v816 = vadd.f32 %v718, %v800
        %v817 = vadd.f32 %v719, %v801
        %v818 = vadd.f32 %v720, %v802
        %v819 = vadd.f32 %v721, %v803
        %v820 = vadd.f32 %v722, %v804
        %v821 = vadd.f32 %v723, %v805
        %v822 = vadd.f32 %v724, %v806
        %v823 = vadd.f32 %v725, %v807
        %v824 = vadd.f32 %v726, %v808
        %v825 = vadd.f32 %v727, %v809
        %p826 = scmp.eq.s32.totalorder %s27, 0
        // Predicated region
        $region53: #{tpu_custom_call.1} parent=47 // pred_check
          %p827 = pneg %p826
        $region54: #{tpu_custom_call.1} parent=47 // pred_check_branch
          %829 = sbr.rel (%p827) target = $region56
        $region55: #{tpu_custom_call.1} parent=47 // pred_region
          %p830 = scmp.eq.s32.totalorder %s28, 0
          // Predicated region
          $region57: #{tpu_custom_call.1} parent=55 // pred_check
            %p831 = pneg %p830
          $region58: #{tpu_custom_call.1} parent=55 // pred_check_branch
            %833 = sbr.rel (%p831) target = $region60
          $region59: #{tpu_custom_call.1} parent=55 // pred_region
            %834 = vst [vmem:[#allocation5] sm:$0x3] 0.0
          $region60: #{tpu_custom_call.1} parent=55 // pred_fallthru
            _
          %v835 = vld [vmem:[#allocation5] sm:$0x1]
          %v836 = vadd.f32 %v810, %v811
          %v837 = vadd.f32 %v836, %v812
          %v838 = vadd.f32 %v837, %v813
          %v839 = vadd.f32 %v838, %v814
          %v840 = vadd.f32 %v839, %v815
          %v841 = vadd.f32 %v840, %v816
          %v842 = vadd.f32 %v841, %v817
          %v843 = vadd.f32 %v842, %v818
          %v844 = vadd.f32 %v843, %v819
          %v845 = vadd.f32 %v844, %v820
          %v846 = vadd.f32 %v845, %v821
          %v847 = vadd.f32 %v846, %v822
          %v848 = vadd.f32 %v847, %v823
          %v849 = vadd.f32 %v848, %v824
          %v850 = vadd.f32 %v849, %v825
          %v851 = vrot.slane %v850, 4
          %v852 = vadd.f32 %v850, %v851
          %v853 = vrot.slane %v852, 2
          %v854 = vadd.f32 %v852, %v853
          %v855 = vrot.slane %v854, 1
          %v856 = vadd.f32 %v854, %v855
          %v857 = vadd.f32 %v835, %v856
          %858 = vst [vmem:[#allocation5] sm:$0x1] %v857
          %v859 = vld [vmem:[#allocation5 + $0x1] sm:$0x1]
          %v860 = vmul.f32 %v810, %v810
          %v861 = vmul.f32 %v811, %v811
          %v862 = vmul.f32 %v812, %v812
          %v863 = vmul.f32 %v813, %v813
          %v864 = vmul.f32 %v814, %v814
          %v865 = vmul.f32 %v815, %v815
          %v866 = vmul.f32 %v816, %v816
          %v867 = vmul.f32 %v817, %v817
          %v868 = vmul.f32 %v818, %v818
          %v869 = vmul.f32 %v819, %v819
          %v870 = vmul.f32 %v820, %v820
          %v871 = vmul.f32 %v821, %v821
          %v872 = vmul.f32 %v822, %v822
          %v873 = vmul.f32 %v823, %v823
          %v874 = vmul.f32 %v824, %v824
          %v875 = vmul.f32 %v825, %v825
          %v876 = vadd.f32 %v860, %v861
          %v877 = vadd.f32 %v876, %v862
          %v878 = vadd.f32 %v877, %v863
          %v879 = vadd.f32 %v878, %v864
          %v880 = vadd.f32 %v879, %v865
          %v881 = vadd.f32 %v880, %v866
          %v882 = vadd.f32 %v881, %v867
          %v883 = vadd.f32 %v882, %v868
          %v884 = vadd.f32 %v883, %v869
          %v885 = vadd.f32 %v884, %v870
          %v886 = vadd.f32 %v885, %v871
          %v887 = vadd.f32 %v886, %v872
          %v888 = vadd.f32 %v887, %v873
          %v889 = vadd.f32 %v888, %v874
          %v890 = vadd.f32 %v889, %v875
          %v891 = vrot.slane %v890, 4
          %v892 = vadd.f32 %v890, %v891
          %v893 = vrot.slane %v892, 2
          %v894 = vadd.f32 %v892, %v893
          %v895 = vrot.slane %v894, 1
          %v896 = vadd.f32 %v894, %v895
          %v897 = vadd.f32 %v859, %v896
          %898 = vst [vmem:[#allocation5 + $0x1] sm:$0x1] %v897
          // Predicated region
          $region61: #{tpu_custom_call.1} parent=55 // pred_check
            %p899 = pneg %p830
          $region62: #{tpu_custom_call.1} parent=55 // pred_check_branch
            %901 = sbr.rel (%p899) target = $region64
          $region63: #{tpu_custom_call.1} parent=55 // pred_region
            %v902 = vld [vmem:[#allocation5] sm:$0x1]
            %v903 = vmul.f32 %v902, 0.125
            %v904 = vld [vmem:[#allocation5 + $0x1] sm:$0x1]
            %v905 = vmul.f32 %v904, 0.125
            %v906 = vmul.f32 %v903, %v903
            %v907 = vsub.f32 %v905, %v906
            %v908 = vmax.f32 %v907, 0.0
            %v909 = vld [vmem:[%s2] sm:$0x1]
            %v910 = vadd.f32 %v908, 1e-05
            %v911 = vrsqrt.pop %v910
            %v912 = vmul.f32 %v911, %v910
            %v913 = vmul.f32 %v912, %v911
            %v914 = vmul.f32 0.5, %v913
            %v915 = vsub.f32 1.5, %v914
            %v916 = vmul.f32 %v911, %v915
            %vm917 = vweird.f32 %v910
            %vm918 = vweird.f32 %v911
            %vm919 = vmor %vm917, %vm918
            %v920 = vsel %vm919, %v911, %v916
            %v921 = vmul.f32 %v909, %v920
            %v922 = vld [vmem:[#allocation2] sm:$0x1]
            %v923 = vmul.f32 %v903, %v921
            %v924 = vsub.f32 %v922, %v923
            %925 = vst [vmem:[#allocation5] sm:$0x1] %v921
            %926 = vst [vmem:[#allocation5 + $0x1] sm:$0x1] %v924
          $region64: #{tpu_custom_call.1} parent=55 // pred_fallthru
            _
        $region56: #{tpu_custom_call.1} parent=47 // pred_fallthru
          _
        %p927 = scmp.eq.s32.totalorder %s27, 1
        // Predicated region
        $region65: #{tpu_custom_call.1} parent=47 // pred_check
          %p928 = pneg %p927
        $region66: #{tpu_custom_call.1} parent=47 // pred_check_branch
          %930 = sbr.rel (%p928) target = $region68
        $region67: #{tpu_custom_call.1} parent=47 // pred_region
          %p931 = scmp.eq.s32.totalorder %s28, 0
          // Predicated region
          $region69: #{tpu_custom_call.1} parent=67 // pred_check
            %p932 = pneg %p931
          $region70: #{tpu_custom_call.1} parent=67 // pred_check_branch
            %934 = sbr.rel (%p932) target = $region72
          $region71: #{tpu_custom_call.1} parent=67 // pred_region
            %935 = vst [vmem:[#allocation6] sm:$0xf] 0.0
          $region72: #{tpu_custom_call.1} parent=67 // pred_fallthru
            _
          %v936 = vld [vmem:[#allocation5] sm:$0x1]
          %v937 = vperm.slane %v936, 0
          %v938 = vmul.f32 %v810, %v937
          %v939 = vmul.f32 %v811, %v937
          %v940 = vmul.f32 %v812, %v937
          %v941 = vmul.f32 %v813, %v937
          %v942 = vmul.f32 %v814, %v937
          %v943 = vmul.f32 %v815, %v937
          %v944 = vmul.f32 %v816, %v937
          %v945 = vmul.f32 %v817, %v937
          %v946 = vmul.f32 %v818, %v937
          %v947 = vmul.f32 %v819, %v937
          %v948 = vmul.f32 %v820, %v937
          %v949 = vmul.f32 %v821, %v937
          %v950 = vmul.f32 %v822, %v937
          %v951 = vmul.f32 %v823, %v937
          %v952 = vmul.f32 %v824, %v937
          %v953 = vmul.f32 %v825, %v937
          %v954 = vld [vmem:[#allocation5 + $0x1] sm:$0x1]
          %v955 = vperm.slane %v954, 0
          %v956 = vadd.f32 %v938, %v955
          %v957 = vadd.f32 %v939, %v955
          %v958 = vadd.f32 %v940, %v955
          %v959 = vadd.f32 %v941, %v955
          %v960 = vadd.f32 %v942, %v955
          %v961 = vadd.f32 %v943, %v955
          %v962 = vadd.f32 %v944, %v955
          %v963 = vadd.f32 %v945, %v955
          %v964 = vadd.f32 %v946, %v955
          %v965 = vadd.f32 %v947, %v955
          %v966 = vadd.f32 %v948, %v955
          %v967 = vadd.f32 %v949, %v955
          %v968 = vadd.f32 %v950, %v955
          %v969 = vadd.f32 %v951, %v955
          %v970 = vadd.f32 %v952, %v955
          %v971 = vadd.f32 %v953, %v955
          %v972 = vmax.f32 %v956, 0.0
          %v973 = vmax.f32 %v957, 0.0
          %v974 = vmax.f32 %v958, 0.0
          %v975 = vmax.f32 %v959, 0.0
          %v976 = vmax.f32 %v960, 0.0
          %v977 = vmax.f32 %v961, 0.0
          %v978 = vmax.f32 %v962, 0.0
          %v979 = vmax.f32 %v963, 0.0
          %v980 = vmax.f32 %v964, 0.0
          %v981 = vmax.f32 %v965, 0.0
          %v982 = vmax.f32 %v966, 0.0
          %v983 = vmax.f32 %v967, 0.0
          %v984 = vmax.f32 %v968, 0.0
          %v985 = vmax.f32 %v969, 0.0
          %v986 = vmax.f32 %v970, 0.0
          %v987 = vmax.f32 %v971, 0.0
          %s988 = smul.u32 %s28, 128
          %v989 = vlaneseq
          %v990 = vshrl.u32 %v989, 7
          %v991 = vadd.s32 %v990, 8
          %v992 = vadd.s32 %v990, 16
          %v993 = vadd.s32 %v990, 24
          %v994 = vadd.s32 %v990, 32
          %v995 = vadd.s32 %v990, 40
          %v996 = vadd.s32 %v990, 48
          %v997 = vadd.s32 %v990, 56
          %v998 = vadd.s32 %v990, 64
          %v999 = vadd.s32 %v990, 72
          %v1000 = vadd.s32 %v990, 80
          %v1001 = vadd.s32 %v990, 88
          %v1002 = vadd.s32 %v990, 96
          %v1003 = vadd.s32 %v990, 104
          %v1004 = vadd.s32 %v990, 112
          %v1005 = vadd.s32 %v990, 120
          %v1006 = vstv %s988
          %v1007 = vadd.s32 %v1006, %v990
          %v1008 = vadd.s32 %v1006, %v991
          %v1009 = vadd.s32 %v1006, %v992
          %v1010 = vadd.s32 %v1006, %v993
          %v1011 = vadd.s32 %v1006, %v994
          %v1012 = vadd.s32 %v1006, %v995
          %v1013 = vadd.s32 %v1006, %v996
          %v1014 = vadd.s32 %v1006, %v997
          %v1015 = vadd.s32 %v1006, %v998
          %v1016 = vadd.s32 %v1006, %v999
          %v1017 = vadd.s32 %v1006, %v1000
          %v1018 = vadd.s32 %v1006, %v1001
          %v1019 = vadd.s32 %v1006, %v1002
          %v1020 = vadd.s32 %v1006, %v1003
          %v1021 = vadd.s32 %v1006, %v1004
          %v1022 = vadd.s32 %v1006, %v1005
          %vm1023 = vcmp.lt.s32.totalorder %v1007, 8
          %vm1024 = vcmp.lt.s32.totalorder %v1008, 8
          %vm1025 = vcmp.lt.s32.totalorder %v1009, 8
          %vm1026 = vcmp.lt.s32.totalorder %v1010, 8
          %vm1027 = vcmp.lt.s32.totalorder %v1011, 8
          %vm1028 = vcmp.lt.s32.totalorder %v1012, 8
          %vm1029 = vcmp.lt.s32.totalorder %v1013, 8
          %vm1030 = vcmp.lt.s32.totalorder %v1014, 8
          %vm1031 = vcmp.lt.s32.totalorder %v1015, 8
          %vm1032 = vcmp.lt.s32.totalorder %v1016, 8
          %vm1033 = vcmp.lt.s32.totalorder %v1017, 8
          %vm1034 = vcmp.lt.s32.totalorder %v1018, 8
          %vm1035 = vcmp.lt.s32.totalorder %v1019, 8
          %vm1036 = vcmp.lt.s32.totalorder %v1020, 8
          %vm1037 = vcmp.lt.s32.totalorder %v1021, 8
          %vm1038 = vcmp.lt.s32.totalorder %v1022, 8
          %v1039 = vsel %vm1023, 1, 0
          %v1040 = vsel %vm1024, 1, 0
          %v1041 = vsel %vm1025, 1, 0
          %v1042 = vsel %vm1026, 1, 0
          %v1043 = vsel %vm1027, 1, 0
          %v1044 = vsel %vm1028, 1, 0
          %v1045 = vsel %vm1029, 1, 0
          %v1046 = vsel %vm1030, 1, 0
          %v1047 = vsel %vm1031, 1, 0
          %v1048 = vsel %vm1032, 1, 0
          %v1049 = vsel %vm1033, 1, 0
          %v1050 = vsel %vm1034, 1, 0
          %v1051 = vsel %vm1035, 1, 0
          %v1052 = vsel %vm1036, 1, 0
          %v1053 = vsel %vm1037, 1, 0
          %v1054 = vsel %vm1038, 1, 0
          %vm1055 = vcmp.eq.s32.totalorder %v1039, 1
          %vm1056 = vcmp.eq.s32.totalorder %v1040, 1
          %vm1057 = vcmp.eq.s32.totalorder %v1041, 1
          %vm1058 = vcmp.eq.s32.totalorder %v1042, 1
          %vm1059 = vcmp.eq.s32.totalorder %v1043, 1
          %vm1060 = vcmp.eq.s32.totalorder %v1044, 1
          %vm1061 = vcmp.eq.s32.totalorder %v1045, 1
          %vm1062 = vcmp.eq.s32.totalorder %v1046, 1
          %vm1063 = vcmp.eq.s32.totalorder %v1047, 1
          %vm1064 = vcmp.eq.s32.totalorder %v1048, 1
          %vm1065 = vcmp.eq.s32.totalorder %v1049, 1
          %vm1066 = vcmp.eq.s32.totalorder %v1050, 1
          %vm1067 = vcmp.eq.s32.totalorder %v1051, 1
          %vm1068 = vcmp.eq.s32.totalorder %v1052, 1
          %vm1069 = vcmp.eq.s32.totalorder %v1053, 1
          %vm1070 = vcmp.eq.s32.totalorder %v1054, 1
          %v1071 = vsel %vm1055, %v972, 0.0
          %v1072 = vsel %vm1056, %v973, 0.0
          %v1073 = vsel %vm1057, %v974, 0.0
          %v1074 = vsel %vm1058, %v975, 0.0
          %v1075 = vsel %vm1059, %v976, 0.0
          %v1076 = vsel %vm1060, %v977, 0.0
          %v1077 = vsel %vm1061, %v978, 0.0
          %v1078 = vsel %vm1062, %v979, 0.0
          %v1079 = vsel %vm1063, %v980, 0.0
          %v1080 = vsel %vm1064, %v981, 0.0
          %v1081 = vsel %vm1065, %v982, 0.0
          %v1082 = vsel %vm1066, %v983, 0.0
          %v1083 = vsel %vm1067, %v984, 0.0
          %v1084 = vsel %vm1068, %v985, 0.0
          %v1085 = vsel %vm1069, %v986, 0.0
          %v1086 = vsel %vm1070, %v987, 0.0
          %v1087 = vpack.c.bf16 %v1072, %v1071
          %v1088 = vpack.c.bf16 %v1074, %v1073
          %v1089 = vpack.c.bf16 %v1076, %v1075
          %v1090 = vpack.c.bf16 %v1078, %v1077
          %v1091 = vpack.c.bf16 %v1080, %v1079
          %v1092 = vpack.c.bf16 %v1082, %v1081
          %v1093 = vpack.c.bf16 %v1084, %v1083
          %v1094 = vpack.c.bf16 %v1086, %v1085
          %v1095 = vld [vmem:[%s4] sm:$0xff]
          %v1096 = vld [vmem:[%s4 + $0x8] sm:$0xff]
          %v1097 = vld [vmem:[%s4 + $0x10] sm:$0xff]
          %v1098 = vld [vmem:[%s4 + $0x18] sm:$0xff]
          %v1099 = vld [vmem:[%s4 + $0x20] sm:$0xff]
          %v1100 = vld [vmem:[%s4 + $0x28] sm:$0xff]
          %v1101 = vld [vmem:[%s4 + $0x30] sm:$0xff]
          %v1102 = vld [vmem:[%s4 + $0x38] sm:$0xff]
          %v1103 = vld [vmem:[%s4 + $0x40] sm:$0xff]
          %v1104 = vld [vmem:[%s4 + $0x48] sm:$0xff]
          %v1105 = vld [vmem:[%s4 + $0x50] sm:$0xff]
          %v1106 = vld [vmem:[%s4 + $0x58] sm:$0xff]
          %v1107 = vld [vmem:[%s4 + $0x60] sm:$0xff]
          %v1108 = vld [vmem:[%s4 + $0x68] sm:$0xff]
          %v1109 = vld [vmem:[%s4 + $0x70] sm:$0xff]
          %v1110 = vld [vmem:[%s4 + $0x78] sm:$0xff]
          %v1127 = vunpack.c.l.b16 %v1095
          %v1128 = vunpack.c.h.b16 %v1095
          %v1129 = vunpack.c.l.b16 %v1096
          %v1130 = vunpack.c.h.b16 %v1096
          %v1131 = vunpack.c.l.b16 %v1097
          %v1132 = vunpack.c.h.b16 %v1097
          %v1133 = vunpack.c.l.b16 %v1098
          %v1134 = vunpack.c.h.b16 %v1098
          %v1135 = vunpack.c.l.b16 %v1099
          %v1136 = vunpack.c.h.b16 %v1099
          %v1137 = vunpack.c.l.b16 %v1100
          %v1138 = vunpack.c.h.b16 %v1100
          %v1139 = vunpack.c.l.b16 %v1101
          %v1140 = vunpack.c.h.b16 %v1101
          %v1141 = vunpack.c.l.b16 %v1102
          %v1142 = vunpack.c.h.b16 %v1102
          %v1143 = vunpack.c.l.b16 %v1103
          %v1144 = vunpack.c.h.b16 %v1103
          %v1145 = vunpack.c.l.b16 %v1104
          %v1146 = vunpack.c.h.b16 %v1104
          %v1147 = vunpack.c.l.b16 %v1105
          %v1148 = vunpack.c.h.b16 %v1105
          %v1149 = vunpack.c.l.b16 %v1106
          %v1150 = vunpack.c.h.b16 %v1106
          %v1151 = vunpack.c.l.b16 %v1107
          %v1152 = vunpack.c.h.b16 %v1107
          %v1153 = vunpack.c.l.b16 %v1108
          %v1154 = vunpack.c.h.b16 %v1108
          %v1155 = vunpack.c.l.b16 %v1109
          %v1156 = vunpack.c.h.b16 %v1109
          %v1157 = vunpack.c.l.b16 %v1110
          %v1158 = vunpack.c.h.b16 %v1110
          %v1159 = vpack.c.b16 %v1129, %v1127
          %v1160 = vpack.c.b16 %v1130, %v1128
          %v1161 = vpack.c.b16 %v1133, %v1131
          %v1162 = vpack.c.b16 %v1134, %v1132
          %v1163 = vpack.c.b16 %v1137, %v1135
          %v1164 = vpack.c.b16 %v1138, %v1136
          %v1165 = vpack.c.b16 %v1141, %v1139
          %v1166 = vpack.c.b16 %v1142, %v1140
          %v1167 = vpack.c.b16 %v1145, %v1143
          %v1168 = vpack.c.b16 %v1146, %v1144
          %v1169 = vpack.c.b16 %v1149, %v1147
          %v1170 = vpack.c.b16 %v1150, %v1148
          %v1171 = vpack.c.b16 %v1153, %v1151
          %v1172 = vpack.c.b16 %v1154, %v1152
          %v1173 = vpack.c.b16 %v1157, %v1155
          %v1174 = vpack.c.b16 %v1158, %v1156
          %1191 = vmatpush.bf16.msra.mxu0 %v1173
          %1192 = vmatpush.bf16.msra.mxu0 %v1171
          %1193 = vmatpush.bf16.msra.mxu0 %v1169
          %1194 = vmatpush.bf16.msra.mxu0 %v1167
          %1195 = vmatpush.bf16.msra.mxu0 %v1165
          %1196 = vmatpush.bf16.msra.mxu0 %v1163
          %1197 = vmatpush.bf16.msra.mxu0 %v1161
          %1198 = vmatpush.bf16.msra.mxu0 %v1159
          %1199 = vmatmul.bf16.gmra.mxu0 %v1087
          %v1200 = vpop.f32.mrf.mxu0
          %v1201 = vadd.f32 0.0, %v1200
          %v1202 = vpop.f32.mrf.mxu0
          %v1203 = vadd.f32 0.0, %v1202
          %1204 = vmatmul.bf16.gmra.mxu0 %v1088
          %v1205 = vpop.f32.mrf.mxu0
          %v1206 = vadd.f32 0.0, %v1205
          %v1207 = vpop.f32.mrf.mxu0
          %v1208 = vadd.f32 0.0, %v1207
          %1209 = vmatmul.bf16.gmra.mxu0 %v1089
          %v1210 = vpop.f32.mrf.mxu0
          %v1211 = vadd.f32 0.0, %v1210
          %v1212 = vpop.f32.mrf.mxu0
          %v1213 = vadd.f32 0.0, %v1212
          %1214 = vmatmul.bf16.gmra.mxu0 %v1090
          %v1215 = vpop.f32.mrf.mxu0
          %v1216 = vadd.f32 0.0, %v1215
          %v1217 = vpop.f32.mrf.mxu0
          %v1218 = vadd.f32 0.0, %v1217
          %1219 = vmatmul.bf16.gmra.mxu0 %v1091
          %v1220 = vpop.f32.mrf.mxu0
          %v1221 = vadd.f32 0.0, %v1220
          %v1222 = vpop.f32.mrf.mxu0
          %v1223 = vadd.f32 0.0, %v1222
          %1224 = vmatmul.bf16.gmra.mxu0 %v1092
          %v1225 = vpop.f32.mrf.mxu0
          %v1226 = vadd.f32 0.0, %v1225
          %v1227 = vpop.f32.mrf.mxu0
          %v1228 = vadd.f32 0.0, %v1227
          %1229 = vmatmul.bf16.gmra.mxu0 %v1093
          %v1230 = vpop.f32.mrf.mxu0
          %v1231 = vadd.f32 0.0, %v1230
          %v1232 = vpop.f32.mrf.mxu0
          %v1233 = vadd.f32 0.0, %v1232
          %1234 = vmatmul.bf16.gmra.mxu0 %v1094
          %v1235 = vpop.f32.mrf.mxu0
          %v1236 = vadd.f32 0.0, %v1235
          %v1237 = vpop.f32.mrf.mxu0
          %v1238 = vadd.f32 0.0, %v1237
          %1239 = vdwg.mxu0
          %1240 = vmatpush.bf16.msra.mxu0 %v1174
          %1241 = vmatpush.bf16.msra.mxu0 %v1172
          %1242 = vmatpush.bf16.msra.mxu0 %v1170
          %1243 = vmatpush.bf16.msra.mxu0 %v1168
          %1244 = vmatpush.bf16.msra.mxu0 %v1166
          %1245 = vmatpush.bf16.msra.mxu0 %v1164
          %1246 = vmatpush.bf16.msra.mxu0 %v1162
          %1247 = vmatpush.bf16.msra.mxu0 %v1160
          %1248 = vmatmul.bf16.gmra.mxu0 %v1087
          %v1249 = vpop.f32.mrf.mxu0
          %v1250 = vadd.f32 0.0, %v1249
          %v1251 = vpop.f32.mrf.mxu0
          %v1252 = vadd.f32 0.0, %v1251
          %1253 = vmatmul.bf16.gmra.mxu0 %v1088
          %v1254 = vpop.f32.mrf.mxu0
          %v1255 = vadd.f32 0.0, %v1254
          %v1256 = vpop.f32.mrf.mxu0
          %v1257 = vadd.f32 0.0, %v1256
          %1258 = vmatmul.bf16.gmra.mxu0 %v1089
          %v1259 = vpop.f32.mrf.mxu0
          %v1260 = vadd.f32 0.0, %v1259
          %v1261 = vpop.f32.mrf.mxu0
          %v1262 = vadd.f32 0.0, %v1261
          %1263 = vmatmul.bf16.gmra.mxu0 %v1090
          %v1264 = vpop.f32.mrf.mxu0
          %v1265 = vadd.f32 0.0, %v1264
          %v1266 = vpop.f32.mrf.mxu0
          %v1267 = vadd.f32 0.0, %v1266
          %1268 = vmatmul.bf16.gmra.mxu0 %v1091
          %v1269 = vpop.f32.mrf.mxu0
          %v1270 = vadd.f32 0.0, %v1269
          %v1271 = vpop.f32.mrf.mxu0
          %v1272 = vadd.f32 0.0, %v1271
          %1273 = vmatmul.bf16.gmra.mxu0 %v1092
          %v1274 = vpop.f32.mrf.mxu0
          %v1275 = vadd.f32 0.0, %v1274
          %v1276 = vpop.f32.mrf.mxu0
          %v1277 = vadd.f32 0.0, %v1276
          %1278 = vmatmul.bf16.gmra.mxu0 %v1093
          %v1279 = vpop.f32.mrf.mxu0
          %v1280 = vadd.f32 0.0, %v1279
          %v1281 = vpop.f32.mrf.mxu0
          %v1282 = vadd.f32 0.0, %v1281
          %1283 = vmatmul.bf16.gmra.mxu0 %v1094
          %v1284 = vpop.f32.mrf.mxu0
          %v1285 = vadd.f32 0.0, %v1284
          %v1286 = vpop.f32.mrf.mxu0
          %v1287 = vadd.f32 0.0, %v1286
          %1288 = vdwg.mxu0
          %v1289 = vld [vmem:[#allocation6] ss:$2 sm:$0x3]
          %v1290 = vadd.f32 %v1201, %v1203
          %v1291 = vadd.f32 %v1290, %v1206
          %v1292 = vadd.f32 %v1291, %v1208
          %v1293 = vadd.f32 %v1292, %v1211
          %v1294 = vadd.f32 %v1293, %v1213
          %v1295 = vadd.f32 %v1294, %v1216
          %v1296 = vadd.f32 %v1295, %v1218
          %v1297 = vadd.f32 %v1296, %v1221
          %v1298 = vadd.f32 %v1297, %v1223
          %v1299 = vadd.f32 %v1298, %v1226
          %v1300 = vadd.f32 %v1299, %v1228
          %v1301 = vadd.f32 %v1300, %v1231
          %v1302 = vadd.f32 %v1301, %v1233
          %v1303 = vadd.f32 %v1302, %v1236
          %v1304 = vadd.f32 %v1303, %v1238
          %v1305 = vrot.slane %v1304, 4
          %v1306 = vadd.f32 %v1304, %v1305
          %v1307 = vrot.slane %v1306, 2
          %v1308 = vadd.f32 %v1306, %v1307
          %v1309 = vrot.slane %v1308, 1
          %v1310 = vadd.f32 %v1308, %v1309
          %v1311 = vadd.f32 %v1250, %v1252
          %v1312 = vadd.f32 %v1311, %v1255
          %v1313 = vadd.f32 %v1312, %v1257
          %v1314 = vadd.f32 %v1313, %v1260
          %v1315 = vadd.f32 %v1314, %v1262
          %v1316 = vadd.f32 %v1315, %v1265
          %v1317 = vadd.f32 %v1316, %v1267
          %v1318 = vadd.f32 %v1317, %v1270
          %v1319 = vadd.f32 %v1318, %v1272
          %v1320 = vadd.f32 %v1319, %v1275
          %v1321 = vadd.f32 %v1320, %v1277
          %v1322 = vadd.f32 %v1321, %v1280
          %v1323 = vadd.f32 %v1322, %v1282
          %v1324 = vadd.f32 %v1323, %v1285
          %v1325 = vadd.f32 %v1324, %v1287
          %v1326 = vrot.slane %v1325, 4
          %v1327 = vadd.f32 %v1325, %v1326
          %v1328 = vrot.slane %v1327, 2
          %v1329 = vadd.f32 %v1327, %v1328
          %v1330 = vrot.slane %v1329, 1
          %v1331 = vadd.f32 %v1329, %v1330
          %v1334 = vrot.slane %v1331, 7
          %vm1335 = vcmask 1040384
          %v1336 = vsel %vm1335, %v1310, %v1334
          %v1338 = vadd.f32 %v1289, %v1336
          %v1339 = vlaneseq
          %vm1340 = vcmp.ge.s32.totalorder %v1339, 0
          %vm1341 = vcmp.lt.s32.totalorder %v1339, 256
          %vm1342 = vmand %vm1340, %vm1341
          %1343 = vst.msk [vmem:[#allocation6] ss:$2 sm:$0x3] %vm1342, %v1338
          %s1344 = scalar_lea.vmem [#allocation6], 1
          %v1345 = vld [vmem:[%s1344] ss:$2 sm:$0x3]
          %v1346 = vmul.f32 %v1201, %v1201
          %v1347 = vmul.f32 %v1250, %v1250
          %v1348 = vmul.f32 %v1203, %v1203
          %v1349 = vmul.f32 %v1252, %v1252
          %v1350 = vmul.f32 %v1206, %v1206
          %v1351 = vmul.f32 %v1255, %v1255
          %v1352 = vmul.f32 %v1208, %v1208
          %v1353 = vmul.f32 %v1257, %v1257
          %v1354 = vmul.f32 %v1211, %v1211
          %v1355 = vmul.f32 %v1260, %v1260
          %v1356 = vmul.f32 %v1213, %v1213
          %v1357 = vmul.f32 %v1262, %v1262
          %v1358 = vmul.f32 %v1216, %v1216
          %v1359 = vmul.f32 %v1265, %v1265
          %v1360 = vmul.f32 %v1218, %v1218
          %v1361 = vmul.f32 %v1267, %v1267
          %v1362 = vmul.f32 %v1221, %v1221
          %v1363 = vmul.f32 %v1270, %v1270
          %v1364 = vmul.f32 %v1223, %v1223
          %v1365 = vmul.f32 %v1272, %v1272
          %v1366 = vmul.f32 %v1226, %v1226
          %v1367 = vmul.f32 %v1275, %v1275
          %v1368 = vmul.f32 %v1228, %v1228
          %v1369 = vmul.f32 %v1277, %v1277
          %v1370 = vmul.f32 %v1231, %v1231
          %v1371 = vmul.f32 %v1280, %v1280
          %v1372 = vmul.f32 %v1233, %v1233
          %v1373 = vmul.f32 %v1282, %v1282
          %v1374 = vmul.f32 %v1236, %v1236
          %v1375 = vmul.f32 %v1285, %v1285
          %v1376 = vmul.f32 %v1238, %v1238
          %v1377 = vmul.f32 %v1287, %v1287
          %v1378 = vadd.f32 %v1346, %v1348
          %v1379 = vadd.f32 %v1378, %v1350
          %v1380 = vadd.f32 %v1379, %v1352
          %v1381 = vadd.f32 %v1380, %v1354
          %v1382 = vadd.f32 %v1381, %v1356
          %v1383 = vadd.f32 %v1382, %v1358
          %v1384 = vadd.f32 %v1383, %v1360
          %v1385 = vadd.f32 %v1384, %v1362
          %v1386 = vadd.f32 %v1385, %v1364
          %v1387 = vadd.f32 %v1386, %v1366
          %v1388 = vadd.f32 %v1387, %v1368
          %v1389 = vadd.f32 %v1388, %v1370
          %v1390 = vadd.f32 %v1389, %v1372
          %v1391 = vadd.f32 %v1390, %v1374
          %v1392 = vadd.f32 %v1391, %v1376
          %v1393 = vrot.slane %v1392, 4
          %v1394 = vadd.f32 %v1392, %v1393
          %v1395 = vrot.slane %v1394, 2
          %v1396 = vadd.f32 %v1394, %v1395
          %v1397 = vrot.slane %v1396, 1
          %v1398 = vadd.f32 %v1396, %v1397
          %v1399 = vadd.f32 %v1347, %v1349
          %v1400 = vadd.f32 %v1399, %v1351
          %v1401 = vadd.f32 %v1400, %v1353
          %v1402 = vadd.f32 %v1401, %v1355
          %v1403 = vadd.f32 %v1402, %v1357
          %v1404 = vadd.f32 %v1403, %v1359
          %v1405 = vadd.f32 %v1404, %v1361
          %v1406 = vadd.f32 %v1405, %v1363
          %v1407 = vadd.f32 %v1406, %v1365
          %v1408 = vadd.f32 %v1407, %v1367
          %v1409 = vadd.f32 %v1408, %v1369
          %v1410 = vadd.f32 %v1409, %v1371
          %v1411 = vadd.f32 %v1410, %v1373
          %v1412 = vadd.f32 %v1411, %v1375
          %v1413 = vadd.f32 %v1412, %v1377
          %v1414 = vrot.slane %v1413, 4
          %v1415 = vadd.f32 %v1413, %v1414
          %v1416 = vrot.slane %v1415, 2
          %v1417 = vadd.f32 %v1415, %v1416
          %v1418 = vrot.slane %v1417, 1
          %v1419 = vadd.f32 %v1417, %v1418
          %v1422 = vrot.slane %v1419, 7
          %v1423 = vsel %vm1335, %v1398, %v1422
          %v1425 = vadd.f32 %v1345, %v1423
          %1426 = vst.msk [vmem:[%s1344] ss:$2 sm:$0x3] %vm1342, %v1425
          // Predicated region
          $region73: #{tpu_custom_call.1} parent=67 // pred_check
            %p1427 = pneg %p931
          $region74: #{tpu_custom_call.1} parent=67 // pred_check_branch
            %1429 = sbr.rel (%p1427) target = $region76
          $region75: #{tpu_custom_call.1} parent=67 // pred_region
            %v1430 = vld [vmem:[#allocation6] ss:$2 sm:$0x3]
            %v1431 = vmul.f32 %v1430, 0.125
            %v1432 = vld [vmem:[%s1344] ss:$2 sm:$0x3]
            %v1433 = vmul.f32 %v1432, 0.125
            %v1434 = vmul.f32 %v1431, %v1431
            %v1435 = vsub.f32 %v1433, %v1434
            %v1436 = vmax.f32 %v1435, 0.0
            %v1437 = vld [vmem:[%s5] sm:$0x3]
            %v1438 = vadd.f32 %v1436, 1e-05
            %v1439 = vrsqrt.pop %v1438
            %v1440 = vmul.f32 %v1439, %v1438
            %v1441 = vmul.f32 %v1440, %v1439
            %v1442 = vmul.f32 0.5, %v1441
            %v1443 = vsub.f32 1.5, %v1442
            %v1444 = vmul.f32 %v1439, %v1443
            %vm1445 = vweird.f32 %v1438
            %vm1446 = vweird.f32 %v1439
            %vm1447 = vmor %vm1445, %vm1446
            %v1448 = vsel %vm1447, %v1439, %v1444
            %v1449 = vmul.f32 %v1437, %v1448
            %v1450 = vld [vmem:[%s6] sm:$0x3]
            %v1451 = vmul.f32 %v1431, %v1449
            %v1452 = vsub.f32 %v1450, %v1451
            %1453 = vst.msk [vmem:[#allocation6] ss:$2 sm:$0x3] %vm1342, %v1449
            %1454 = vst.msk [vmem:[%s1344] ss:$2 sm:$0x3] %vm1342, %v1452
          $region76: #{tpu_custom_call.1} parent=67 // pred_fallthru
            _
        $region68: #{tpu_custom_call.1} parent=47 // pred_fallthru
          _
        // Predicated region
        $region77: #{tpu_custom_call.1} parent=47 // pred_check
          %p1455 = pneg %p200
        $region78: #{tpu_custom_call.1} parent=47 // pred_check_branch
          %1457 = sbr.rel (%p1455) target = $region80
        $region79: #{tpu_custom_call.1} parent=47 // pred_region
          %1459 = vsyncadd [#allocation4], 0
          %s1461 = sshll.u32 [#allocation5], 4
          %s1462 = int_to_ptr.vmem [resolvable:$true] %s1461
          %s1463 = sshll.u32 %s7, 4
          %s1464 = int_to_ptr.hbm [resolvable:$true] %s1463
          %1466 = dma.vmem_to_hbm [thread:$0]  %s1462, 32, %s1464, [#allocation4]
        $region80: #{tpu_custom_call.1} parent=47 // pred_fallthru
          _
        // Predicated region
        $region81: #{tpu_custom_call.1} parent=47 // pred_check
          %p1467 = pneg %p221
        $region82: #{tpu_custom_call.1} parent=47 // pred_check_branch
          %1469 = sbr.rel (%p1467) target = $region84
        $region83: #{tpu_custom_call.1} parent=47 // pred_region
          %1471 = vsyncadd [#allocation7], 0
          %s1473 = sshll.u32 [#allocation6], 4
          %s1474 = int_to_ptr.vmem [resolvable:$true] %s1473
          %s1475 = sshll.u32 %s8, 4
          %s1476 = int_to_ptr.hbm [resolvable:$true] %s1475
          %1478 = dma.vmem_to_hbm [thread:$0]  %s1474, 64, %s1476, [#allocation7]
        $region84: #{tpu_custom_call.1} parent=47 // pred_fallthru
          _
        // Predicated region
        $region85: #{tpu_custom_call.1} parent=47 // pred_check
          %p1479 = pneg %p200
        $region86: #{tpu_custom_call.1} parent=47 // pred_check_branch
          %1481 = sbr.rel (%p1479) target = $region88
        $region87: #{tpu_custom_call.1} parent=47 // pred_region
          %1483 = dma.done [#allocation4], 32
        $region88: #{tpu_custom_call.1} parent=47 // pred_fallthru
          _
        // Predicated region
        $region89: #{tpu_custom_call.1} parent=47 // pred_check
          %p1484 = pneg %p221
        $region90: #{tpu_custom_call.1} parent=47 // pred_check_branch
          %1486 = sbr.rel (%p1484) target = $region92
        $region91: #{tpu_custom_call.1} parent=47 // pred_region
          %1488 = dma.done [#allocation7], 64
        $region92: #{tpu_custom_call.1} parent=47 // pred_fallthru
          _
      $region48: #{tpu_custom_call.1} parent=5 // pred_fallthru
        _
      %p1489 = scmp.le.s32.totalorder 2, %s18
      // Predicated region
      $region93: #{tpu_custom_call.1} parent=5 // pred_check
        %p1490 = pneg %p1489
      $region94: #{tpu_custom_call.1} parent=5 // pred_check_branch
        %1492 = sbr.rel (%p1490) target = $region96
      $region95: #{tpu_custom_call.1} parent=5 // pred_region
        %s1493 = ssub.s32 %s18, 2
      $region96: #{tpu_custom_call.1} parent=5 // pred_fallthru
        _
    $region6: #{tpu_custom_call.1} parent=1 // loop_footer
      %s22 = sadd.s32 1, %s18
    $region7: #{tpu_custom_call.1} parent=1 // loop_footer_branch
      %17 = sbr.rel target = $region3
    $region8: #{tpu_custom_call.1} parent=1 // loop_exit
      _
    %1494 = vsyncpa [#allocation3], 1
    %s1495 = scalar_lea.sflag [#allocation3], 1
    %1496 = vsyncpa %s1495, 1
    %1497 = vsyncpa [#allocation4], 1
    %s1498 = scalar_lea.sflag [#allocation4], 1
    %1499 = vsyncpa %s1498, 1
    %1500 = vsyncpa [#allocation7], 1

</llo_original>
